<compile_context>
chip_gen: v5e
topology: v5e:2x2
jax: 0.10.0
libtpu: 0.0.40
codegen_flags: <defaults>
</compile_context>

<pallas_src>
import jax
import jax.numpy as jnp
from jax.experimental import pallas as pl
from jax.experimental.pallas import tpu as pltpu

N_EMBD = 256
HIDDEN = 4 * N_EMBD  # 1024
DROPOUT_VALUE = 0.2  # unused at inference


def ffn_kernel(x_ref, w1_ref, b1_ref, w2_ref, b2_ref, o_ref):
    """One row-tile step of the fused MLP (weights fully resident in VMEM).

    x_ref:  (tm, E)  f32   (cast to bf16 on-chip)
    w1_ref: (E, H)   bf16    b1_ref: (1, H) f32
    w2_ref: (H, E)   bf16    b2_ref: (1, E) f32
    o_ref:  (tm, E)  f32
    """
    # In-kernel f32 -> bf16 cast: VPU slack under the MXU, saves an HBM pass.
    x = x_ref[...].astype(jnp.bfloat16)

    # (tm, E) @ (E, H) on the native bf16 MXU path, f32 accumulation.
    h = jnp.dot(x, w1_ref[...], preferred_element_type=jnp.float32)
    h = jnp.maximum(h + b1_ref[...], 0.0)  # bias + ReLU

    # (tm, H) @ (H, E), written straight to the output tile (no accumulator).
    y = jnp.dot(h.astype(jnp.bfloat16), w2_ref[...],
                preferred_element_type=jnp.float32)
    o_ref[...] = (y + b2_ref[...]).astype(o_ref.dtype)


def _auto_row_tile(m):
    """Pick the largest row tile (<=1024 for v7x VMEM headroom) that still
    leaves >=2 grid steps when possible, so both v7x TensorCores get work.
    Ragged tails are handled by Mosaic's partial-block masking."""
    for cand in (1024, 512, 256, 128):
        if m >= 2 * cand:
            return cand
    # Tiny M: single (sublane-aligned) block covering everything.
    return min(1024, -(-m // 8) * 8)


def feed_forward(x, w1, b1, w2, b2, *, tm=None):
    """x: (B, T, E) float32; weights stored as (in, out), ideally bf16.
    Returns (B, T, E) float32."""
    B, T, E = x.shape
    H = w1.shape[1]
    assert E % 128 == 0 and H % 128 == 0
    M = B * T

    if tm is None:
        tm = _auto_row_tile(M)

    x2d = x.reshape(M, E)  # stays f32; cast happens inside the kernel

    # No-op if params were created in bf16 (init_params does this).
    w1b = w1 if w1.dtype == jnp.bfloat16 else w1.astype(jnp.bfloat16)
    w2b = w2 if w2.dtype == jnp.bfloat16 else w2.astype(jnp.bfloat16)
    b1f = b1.astype(jnp.float32)
    b2f = b2.astype(jnp.float32)

    grid = (pl.cdiv(M, tm),)

    cost = pl.CostEstimate(
        flops=4 * M * E * H,  # two matmuls: 2*M*E*H each
        transcendentals=0,
        bytes_accessed=(M * E * 4          # x (f32) read
                        + M * E * 4        # out (f32) write
                        + E * H * 2        # W1 (bf16), fetched once
                        + H * E * 2        # W2 (bf16), fetched once
                        + H * 4 + E * 4),  # biases
    )

    out2d = pl.pallas_call(
        ffn_kernel,
        out_shape=jax.ShapeDtypeStruct((M, E), jnp.float32),
        grid_spec=pltpu.PrefetchScalarGridSpec(
            num_scalar_prefetch=0,
            grid=grid,
            in_specs=[
                pl.BlockSpec((tm, E), lambda i: (i, 0)),   # x row tile
                pl.BlockSpec((E, H), lambda i: (0, 0)),    # W1 (resident)
                pl.BlockSpec((1, H), lambda i: (0, 0)),    # b1 (resident)
                pl.BlockSpec((H, E), lambda i: (0, 0)),    # W2 (resident)
                pl.BlockSpec((1, E), lambda i: (0, 0)),    # b2 (resident)
            ],
            out_specs=pl.BlockSpec((tm, E), lambda i: (i, 0)),
        ),
        compiler_params=pltpu.CompilerParams(
            dimension_semantics=("parallel",),
            vmem_limit_bytes=32 * 1024 * 1024,
        ),
        cost_estimate=cost,
    )(x2d, w1b, b1f, w2b, b2f)

    return out2d.reshape(B, T, E)


def init_params(key, n_embd=N_EMBD):
    """Deterministic PyTorch-style init: U(-1/sqrt(fan_in), 1/sqrt(fan_in)).
    Weights are stored in bf16 (MXU-native) so no per-call cast is needed."""
    h = 4 * n_embd
    k1, k2, k3, k4 = jax.random.split(key, 4)
    bound1 = 1.0 / jnp.sqrt(n_embd)
    bound2 = 1.0 / jnp.sqrt(h)
    # Stored as (in, out) — transpose of PyTorch's (out, in).
    w1 = jax.random.uniform(k1, (n_embd, h), jnp.float32, -bound1, bound1)
    b1 = jax.random.uniform(k2, (1, h), jnp.float32, -bound1, bound1)
    w2 = jax.random.uniform(k3, (h, n_embd), jnp.float32, -bound2, bound2)
    b2 = jax.random.uniform(k4, (1, n_embd), jnp.float32, -bound2, bound2)
    return w1.astype(jnp.bfloat16), b1, w2.astype(jnp.bfloat16), b2


def _reference(x, w1, b1, w2, b2):
    """Pure-JAX reference with the same bf16-operand / f32-accumulate math."""
    B, T, E = x.shape
    xb = x.reshape(B * T, E).astype(jnp.bfloat16)
    w1b = w1.astype(jnp.bfloat16)
    w2b = w2.astype(jnp.bfloat16)
    h = jnp.dot(xb, w1b, preferred_element_type=jnp.float32) + b1
    h = jnp.maximum(h, 0.0)
    y = jnp.dot(h.astype(jnp.bfloat16), w2b,
                preferred_element_type=jnp.float32) + b2
    return y.reshape(B, T, E)


if __name__ == "__main__":
    key = jax.random.PRNGKey(0)
    kx, kp, kx2 = jax.random.split(key, 3)

    w1, b1, w2, b2 = init_params(kp)

    # Small shape consistent with the module (n_embd = 256).
    B, T = 2, 8
    x = jax.random.normal(kx, (B, T, N_EMBD), jnp.float32)
    out = jax.block_until_ready(feed_forward(x, w1, b1, w2, b2))
    ref = _reference(x, w1, b1, w2, b2)
    assert out.shape == (B, T, N_EMBD)
    assert jnp.allclose(out, ref, atol=5e-3, rtol=5e-3), "mismatch vs reference (small)"

    # Second check exercising multiple row tiles + a ragged (masked) last block.
    B2, T2 = 3, 100  # M = 300 -> tm = 128, grid = 3, last block partial
    x2 = jax.random.normal(kx2, (B2, T2, N_EMBD), jnp.float32)
    out2 = jax.block_until_ready(feed_forward(x2, w1, b1, w2, b2))
    ref2 = _reference(x2, w1, b1, w2, b2)
    assert jnp.allclose(out2, ref2, atol=5e-3, rtol=5e-3), "mismatch vs reference (ragged)"

    print("KERNEL_OK")
</pallas_src>

<mosaic_0001>
module attributes {stable_mosaic.version = 11 : i64} {
  func.func @ffn_kernel(%arg0: i32, %arg1: memref<16x256xf32, #tpu.memory_space<vmem>>, %arg2: memref<256x1024xbf16, #tpu.memory_space<vmem>>, %arg3: memref<1x1024xf32, #tpu.memory_space<vmem>>, %arg4: memref<1024x256xbf16, #tpu.memory_space<vmem>>, %arg5: memref<1x256xf32, #tpu.memory_space<vmem>>, %arg6: memref<16x256xf32, #tpu.memory_space<vmem>>) attributes {dimension_semantics = [#tpu.dimension_semantics<parallel>], iteration_bounds = array<i64: 1>, scalar_prefetch = 0 : i64, scratch_operands = 0 : i64, tpu.core_type = #tpu.core_type<tc>, window_params = [{transform_indices = @transform_0, window_bounds = array<i64: 16, 256>}, {pipeline_mode = #tpu.pipeline_mode<synchronous>, transform_indices = @transform_1, window_bounds = array<i64: 256, 1024>}, {pipeline_mode = #tpu.pipeline_mode<synchronous>, transform_indices = @transform_2, window_bounds = array<i64: 1, 1024>}, {pipeline_mode = #tpu.pipeline_mode<synchronous>, transform_indices = @transform_3, window_bounds = array<i64: 1024, 256>}, {pipeline_mode = #tpu.pipeline_mode<synchronous>, transform_indices = @transform_4, window_bounds = array<i64: 1, 256>}, {transform_indices = @transform_5, window_bounds = array<i64: 16, 256>}]} {
    %c0 = arith.constant 0 : index
    %c0_0 = arith.constant 0 : index
    %0 = vector.load %arg1[%c0, %c0_0] : memref<16x256xf32, #tpu.memory_space<vmem>>, vector<16x256xf32>
    %1 = arith.truncf %0 : vector<16x256xf32> to vector<16x256xbf16>
    %c0_1 = arith.constant 0 : index
    %c0_2 = arith.constant 0 : index
    %2 = vector.load %arg2[%c0_1, %c0_2] : memref<256x1024xbf16, #tpu.memory_space<vmem>>, vector<256x1024xbf16>
    %cst = arith.constant dense<0.000000e+00> : vector<16x1024xf32>
    %3 = tpu.matmul %1, %2, %cst {dimension_numbers = #tpu.dot_dimension_numbers<[1], [0], [0], [1], [0, 0, 1, 1], [], []>} : vector<16x256xbf16>, vector<256x1024xbf16>, vector<16x1024xf32> -> vector<16x1024xf32>
    %c0_3 = arith.constant 0 : index
    %c0_4 = arith.constant 0 : index
    %4 = vector.load %arg3[%c0_3, %c0_4] : memref<1x1024xf32, #tpu.memory_space<vmem>>, vector<1x1024xf32>
    %5 = vector.broadcast %4 : vector<1x1024xf32> to vector<16x1024xf32>
    %6 = arith.addf %3, %5 : vector<16x1024xf32>
    %cst_5 = arith.constant 0.000000e+00 : f32
    %7 = vector.broadcast %cst_5 : f32 to vector<16x1024xf32>
    %8 = arith.maximumf %6, %7 : vector<16x1024xf32>
    %9 = arith.truncf %8 : vector<16x1024xf32> to vector<16x1024xbf16>
    %c0_6 = arith.constant 0 : index
    %c0_7 = arith.constant 0 : index
    %10 = vector.load %arg4[%c0_6, %c0_7] : memref<1024x256xbf16, #tpu.memory_space<vmem>>, vector<1024x256xbf16>
    %cst_8 = arith.constant dense<0.000000e+00> : vector<16x256xf32>
    %11 = tpu.matmul %9, %10, %cst_8 {dimension_numbers = #tpu.dot_dimension_numbers<[1], [0], [0], [1], [0, 0, 1, 1], [], []>} : vector<16x1024xbf16>, vector<1024x256xbf16>, vector<16x256xf32> -> vector<16x256xf32>
    %c0_9 = arith.constant 0 : index
    %c0_10 = arith.constant 0 : index
    %12 = vector.load %arg5[%c0_9, %c0_10] : memref<1x256xf32, #tpu.memory_space<vmem>>, vector<1x256xf32>
    %13 = vector.broadcast %12 : vector<1x256xf32> to vector<16x256xf32>
    %14 = arith.addf %11, %13 : vector<16x256xf32>
    %c0_11 = arith.constant 0 : index
    %c0_12 = arith.constant 0 : index
    %15 = vector.load %arg6[%c0_11, %c0_12] : memref<16x256xf32, #tpu.memory_space<vmem>>, vector<16x256xf32>
    tpu.vector_store %arg6[%c0_11, %c0_12], %14 {strides = array<i32>} : memref<16x256xf32, #tpu.memory_space<vmem>>, vector<16x256xf32>,
    return
  }
  func.func @transform_0(%arg0: i32) -> (i32, i32) {
    %c0_i32 = arith.constant 0 : i32
    %c0_i32_0 = arith.constant 0 : i32
    return %arg0, %c0_i32 : i32, i32
  }
  func.func @transform_1(%arg0: i32) -> (i32, i32) {
    %c0_i32 = arith.constant 0 : i32
    %c0_i32_0 = arith.constant 0 : i32
    %c0_i32_1 = arith.constant 0 : i32
    return %c0_i32, %c0_i32_0 : i32, i32
  }
  func.func @transform_2(%arg0: i32) -> (i32, i32) {
    %c0_i32 = arith.constant 0 : i32
    %c0_i32_0 = arith.constant 0 : i32
    %c0_i32_1 = arith.constant 0 : i32
    return %c0_i32, %c0_i32_0 : i32, i32
  }
  func.func @transform_3(%arg0: i32) -> (i32, i32) {
    %c0_i32 = arith.constant 0 : i32
    %c0_i32_0 = arith.constant 0 : i32
    %c0_i32_1 = arith.constant 0 : i32
    return %c0_i32, %c0_i32_0 : i32, i32
  }
  func.func @transform_4(%arg0: i32) -> (i32, i32) {
    %c0_i32 = arith.constant 0 : i32
    %c0_i32_0 = arith.constant 0 : i32
    %c0_i32_1 = arith.constant 0 : i32
    return %c0_i32, %c0_i32_0 : i32, i32
  }
  func.func @transform_5(%arg0: i32) -> (i32, i32) {
    %c0_i32 = arith.constant 0 : i32
    %c0_i32_0 = arith.constant 0 : i32
    return %arg0, %c0_i32 : i32, i32
  }
}

</mosaic_0001>

<llo_original>
// kernel: tpu_custom_call.1
$region0: #{tpu_custom_call.1}
  #allocation0 [shape = 'u32[]', space=smem, size = 0x4, offset = 0x4, fixed_abs, tag = 'smem constant byte address 0x4 - core index']
  #allocation1 [shape = 'u32[72,128]{1,0:T(1,128)}', space=vmem, size = 0x9000, scoped, tag = 'internal scratch']
  %s0 = inlined_call_operand.hbm [shape: f32[16,256], index: 0, kind: input, shape index: {}]
  %s1 = inlined_call_operand.hbm [shape: bf16[256,1024], index: 1, kind: input, shape index: {}]
  %s2 = inlined_call_operand.hbm [shape: f32[1,1024], index: 2, kind: input, shape index: {}]
  %s3 = inlined_call_operand.hbm [shape: bf16[1024,256], index: 3, kind: input, shape index: {}]
  %s4 = inlined_call_operand.vmem [shape: f32[1,256], index: 4, kind: input, shape index: {}]
  %s5 = inlined_call_operand.hbm [shape: f32[16,256], index: 5, kind: output, shape index: {}]
  %s6 = sld [smem:[#allocation0]]
  $region46: #{tpu_custom_call.1} parent=0
    _
  %s8 = ssub.s32 1, %s6
  %s9 = scalar_select 0, %s8, %s6
  $region1: #{tpu_custom_call.1} parent=0
    #allocation2 [shape = 'u8[16384]{0}', space=vmem, size = 0x4000, scoped, tag = 'input window, operand 0, single buffered']
    #allocation3 [shape = 's32[1]{0}', space=sflag, size = 0x4, scoped, tag = 'scoped memory for tpu_custom_call.1']
    #allocation4 [shape = 's32[1]{0}', space=sflag, size = 0x4, scoped, tag = 'scoped memory for tpu_custom_call.1']
    #allocation5 [shape = 'u8[524288]{0}', space=vmem, size = 0x80000, scoped, tag = 'input window, operand 1, single buffered']
    #allocation6 [shape = 's32[1]{0}', space=sflag, size = 0x4, scoped, tag = 'scoped memory for tpu_custom_call.1']
    #allocation7 [shape = 'u8[4096]{0}', space=vmem, size = 0x1000, scoped, tag = 'input window, operand 2, single buffered']
    #allocation8 [shape = 'u8[524288]{0}', space=vmem, size = 0x80000, scoped, tag = 'input window, operand 3, single buffered']
    #allocation9 [shape = 's32[1]{0}', space=sflag, size = 0x4, scoped, tag = 'scoped memory for tpu_custom_call.1']
    #allocation10 [shape = 'u8[16384]{0}', space=vmem, size = 0x4000, scoped, tag = 'output window, operand 0, single buffered']
    %10 = vsyncpa [#allocation3], 0
    %11 = vsyncpa [#allocation6], 0
    %12 = vsyncpa [#allocation9], 0
    %13 = vsyncpa [#allocation4], 0
    // Predicated region
    $region2: #{tpu_custom_call.1} parent=1 // pred_check
      _
    $region3: #{tpu_custom_call.1} parent=1 // pred_check_branch
      %15 = sbr.rel (0) target = $region5
    $region4: #{tpu_custom_call.1} parent=1 // pred_region
      %17 = vsyncadd [#allocation3], 0
      %s18 = sshll.u32 %s0, 4
      %s19 = int_to_ptr.hbm [resolvable:$true] %s18
      %s20 = sshll.u32 [#allocation2], 4
      %s21 = int_to_ptr.vmem [resolvable:$true] %s20
      %26 = dma.hbm_to_vmem [thread:$0]  %s19, 512, %s21, [#allocation3], 256, 256, 16
    $region5: #{tpu_custom_call.1} parent=1 // pred_fallthru
      _
    // Predicated region
    $region6: #{tpu_custom_call.1} parent=1 // pred_check
      _
    $region7: #{tpu_custom_call.1} parent=1 // pred_check_branch
      %28 = sbr.rel (0) target = $region9
    $region8: #{tpu_custom_call.1} parent=1 // pred_region
      %30 = vsyncadd [#allocation6], 0
      %s31 = sshll.u32 %s1, 4
      %s32 = int_to_ptr.hbm [resolvable:$true] %s31
      %s33 = sshll.u32 [#allocation5], 4
      %s34 = int_to_ptr.vmem [resolvable:$true] %s33
      %39 = dma.hbm_to_vmem [thread:$0]  %s32, 16384, %s34, [#allocation6], 512, 512, 32
    $region9: #{tpu_custom_call.1} parent=1 // pred_fallthru
      _
    // Predicated region
    $region10: #{tpu_custom_call.1} parent=1 // pred_check
      _
    $region11: #{tpu_custom_call.1} parent=1 // pred_check_branch
      %41 = sbr.rel (0) target = $region13
    $region12: #{tpu_custom_call.1} parent=1 // pred_region
      %43 = vsyncadd [#allocation6], 0
      %s45 = sshll.u32 %s2, 4
      %s46 = int_to_ptr.hbm [resolvable:$true] %s45
      %s47 = sshll.u32 [#allocation7], 4
      %s48 = int_to_ptr.vmem [resolvable:$true] %s47
      %50 = dma.hbm_to_vmem [thread:$0]  %s46, 128, %s48, [#allocation6]
    $region13: #{tpu_custom_call.1} parent=1 // pred_fallthru
      _
    // Predicated region
    $region14: #{tpu_custom_call.1} parent=1 // pred_check
      _
    $region15: #{tpu_custom_call.1} parent=1 // pred_check_branch
      %52 = sbr.rel (0) target = $region17
    $region16: #{tpu_custom_call.1} parent=1 // pred_region
      %54 = vsyncadd [#allocation9], 0
      %s55 = sshll.u32 %s3, 4
      %s56 = int_to_ptr.hbm [resolvable:$true] %s55
      %s57 = sshll.u32 [#allocation8], 4
      %s58 = int_to_ptr.vmem [resolvable:$true] %s57
      %63 = dma.hbm_to_vmem [thread:$0]  %s56, 16384, %s58, [#allocation9], 128, 128, 8
    $region17: #{tpu_custom_call.1} parent=1 // pred_fallthru
      _
    // Predicated region
    $region18: #{tpu_custom_call.1} parent=1 // pred_check
      _
    $region19: #{tpu_custom_call.1} parent=1 // pred_check_branch
      %65 = sbr.rel (0) target = $region21
    $region20: #{tpu_custom_call.1} parent=1 // pred_region
      _
    $region21: #{tpu_custom_call.1} parent=1 // pred_fallthru
      _
    // Predicated region
    $region22: #{tpu_custom_call.1} parent=1 // pred_check
      _
    $region23: #{tpu_custom_call.1} parent=1 // pred_check_branch
      %67 = sbr.rel (0) target = $region25
    $region24: #{tpu_custom_call.1} parent=1 // pred_region
      %69 = dma.done [#allocation3], 512
    $region25: #{tpu_custom_call.1} parent=1 // pred_fallthru
      _
    // Predicated region
    $region26: #{tpu_custom_call.1} parent=1 // pred_check
      _
    $region27: #{tpu_custom_call.1} parent=1 // pred_check_branch
      %71 = sbr.rel (0) target = $region29
    $region28: #{tpu_custom_call.1} parent=1 // pred_region
      %73 = dma.done [#allocation6], 16384
    $region29: #{tpu_custom_call.1} parent=1 // pred_fallthru
      _
    // Predicated region
    $region30: #{tpu_custom_call.1} parent=1 // pred_check
      _
    $region31: #{tpu_custom_call.1} parent=1 // pred_check_branch
      %75 = sbr.rel (0) target = $region33
    $region32: #{tpu_custom_call.1} parent=1 // pred_region
      %77 = dma.done [#allocation6], 128
    $region33: #{tpu_custom_call.1} parent=1 // pred_fallthru
      _
    // Predicated region
    $region34: #{tpu_custom_call.1} parent=1 // pred_check
      _
    $region35: #{tpu_custom_call.1} parent=1 // pred_check_branch
      %79 = sbr.rel (0) target = $region37
    $region36: #{tpu_custom_call.1} parent=1 // pred_region
      %81 = dma.done [#allocation9], 16384
    $region37: #{tpu_custom_call.1} parent=1 // pred_fallthru
      _
    %v82 = vld [vmem:[#allocation2] sm:$0xff]
    %v83 = vld [vmem:[#allocation2 + $0x8] sm:$0xff]
    %v84 = vld [vmem:[#allocation2 + $0x10] sm:$0xff]
    %v85 = vld [vmem:[#allocation2 + $0x18] sm:$0xff]
    %v86 = vpack.c.bf16 %v84, %v82
    %v87 = vpack.c.bf16 %v85, %v83
    %v88 = vld [vmem:[#allocation5] sm:$0xff]
    %v89 = vld [vmem:[#allocation5 + $0x8] sm:$0xff]
    %v90 = vld [vmem:[#allocation5 + $0x10] sm:$0xff]
    %v91 = vld [vmem:[#allocation5 + $0x18] sm:$0xff]
    %v92 = vld [vmem:[#allocation5 + $0x20] sm:$0xff]
    %v93 = vld [vmem:[#allocation5 + $0x28] sm:$0xff]
    %v94 = vld [vmem:[#allocation5 + $0x30] sm:$0xff]
    %v95 = vld [vmem:[#allocation5 + $0x38] sm:$0xff]
    %v96 = vld [vmem:[#allocation5 + $0x40] sm:$0xff]
    %v97 = vld [vmem:[#allocation5 + $0x48] sm:$0xff]
    %v98 = vld [vmem:[#allocation5 + $0x50] sm:$0xff]
    %v99 = vld [vmem:[#allocation5 + $0x58] sm:$0xff]
    %v100 = vld [vmem:[#allocation5 + $0x60] sm:$0xff]
    %v101 = vld [vmem:[#allocation5 + $0x68] sm:$0xff]
    %v102 = vld [vmem:[#allocation5 + $0x70] sm:$0xff]
    %v103 = vld [vmem:[#allocation5 + $0x78] sm:$0xff]
    %v104 = vld [vmem:[#allocation5 + $0x80] sm:$0xff]
    %v105 = vld [vmem:[#allocation5 + $0x88] sm:$0xff]
    %v106 = vld [vmem:[#allocation5 + $0x90] sm:$0xff]
    %v107 = vld [vmem:[#allocation5 + $0x98] sm:$0xff]
    %v108 = vld [vmem:[#allocation5 + $0xa0] sm:$0xff]
    %v109 = vld [vmem:[#allocation5 + $0xa8] sm:$0xff]
    %v110 = vld [vmem:[#allocation5 + $0xb0] sm:$0xff]
    %v111 = vld [vmem:[#allocation5 + $0xb8] sm:$0xff]
    %v112 = vld [vmem:[#allocation5 + $0xc0] sm:$0xff]
    %v113 = vld [vmem:[#allocation5 + $0xc8] sm:$0xff]
    %v114 = vld [vmem:[#allocation5 + $0xd0] sm:$0xff]
    %v115 = vld [vmem:[#allocation5 + $0xd8] sm:$0xff]
    %v116 = vld [vmem:[#allocation5 + $0xe0] sm:$0xff]
    %v117 = vld [vmem:[#allocation5 + $0xe8] sm:$0xff]
    %v118 = vld [vmem:[#allocation5 + $0xf0] sm:$0xff]
    %v119 = vld [vmem:[#allocation5 + $0xf8] sm:$0xff]
    %v120 = vld [vmem:[#allocation5 + $0x100] sm:$0xff]
    %v121 = vld [vmem:[#allocation5 + $0x108] sm:$0xff]
    %v122 = vld [vmem:[#allocation5 + $0x110] sm:$0xff]
    %v123 = vld [vmem:[#allocation5 + $0x118] sm:$0xff]
    %v124 = vld [vmem:[#allocation5 + $0x120] sm:$0xff]
    %v125 = vld [vmem:[#allocation5 + $0x128] sm:$0xff]
    %v126 = vld [vmem:[#allocation5 + $0x130] sm:$0xff]
    %v127 = vld [vmem:[#allocation5 + $0x138] sm:$0xff]
    %v128 = vld [vmem:[#allocation5 + $0x140] sm:$0xff]
    %v129 = vld [vmem:[#allocation5 + $0x148] sm:$0xff]
    %v130 = vld [vmem:[#allocation5 + $0x150] sm:$0xff]
    %v131 = vld [vmem:[#allocation5 + $0x158] sm:$0xff]
    %v132 = vld [vmem:[#allocation5 + $0x160] sm:$0xff]
    %v133 = vld [vmem:[#allocation5 + $0x168] sm:$0xff]
    %v134 = vld [vmem:[#allocation5 + $0x170] sm:$0xff]
    %v135 = vld [vmem:[#allocation5 + $0x178] sm:$0xff]
    %v136 = vld [vmem:[#allocation5 + $0x180] sm:$0xff]
    %v137 = vld [vmem:[#allocation5 + $0x188] sm:$0xff]
    %v138 = vld [vmem:[#allocation5 + $0x190] sm:$0xff]
    %v139 = vld [vmem:[#allocation5 + $0x198] sm:$0xff]
    %v140 = vld [vmem:[#allocation5 + $0x1a0] sm:$0xff]
    %v141 = vld [vmem:[#allocation5 + $0x1a8] sm:$0xff]
    %v142 = vld [vmem:[#allocation5 + $0x1b0] sm:$0xff]
    %v143 = vld [vmem:[#allocation5 + $0x1b8] sm:$0xff]
    %v144 = vld [vmem:[#allocation5 + $0x1c0] sm:$0xff]
    %v145 = vld [vmem:[#allocation5 + $0x1c8] sm:$0xff]
    %v146 = vld [vmem:[#allocation5 + $0x1d0] sm:$0xff]
    %v147 = vld [vmem:[#allocation5 + $0x1d8] sm:$0xff]
    %v148 = vld [vmem:[#allocation5 + $0x1e0] sm:$0xff]
    %v149 = vld [vmem:[#allocation5 + $0x1e8] sm:$0xff]
    %v150 = vld [vmem:[#allocation5 + $0x1f0] sm:$0xff]
    %v151 = vld [vmem:[#allocation5 + $0x1f8] sm:$0xff]
    %v152 = vld [vmem:[#allocation5 + $0x200] sm:$0xff]
    %v153 = vld [vmem:[#allocation5 + $0x208] sm:$0xff]
    %v154 = vld [vmem:[#allocation5 + $0x210] sm:$0xff]
    %v155 = vld [vmem:[#allocation5 + $0x218] sm:$0xff]
    %v156 = vld [vmem:[#allocation5 + $0x220] sm:$0xff]
    %v157 = vld [vmem:[#allocation5 + $0x228] sm:$0xff]
    %v158 = vld [vmem:[#allocation5 + $0x230] sm:$0xff]
    %v159 = vld [vmem:[#allocation5 + $0x238] sm:$0xff]
    %v160 = vld [vmem:[#allocation5 + $0x240] sm:$0xff]
    %v161 = vld [vmem:[#allocation5 + $0x248] sm:$0xff]
    %v162 = vld [vmem:[#allocation5 + $0x250] sm:$0xff]
    %v163 = vld [vmem:[#allocation5 + $0x258] sm:$0xff]
    %v164 = vld [vmem:[#allocation5 + $0x260] sm:$0xff]
    %v165 = vld [vmem:[#allocation5 + $0x268] sm:$0xff]
    %v166 = vld [vmem:[#allocation5 + $0x270] sm:$0xff]
    %v167 = vld [vmem:[#allocation5 + $0x278] sm:$0xff]
    %v168 = vld [vmem:[#allocation5 + $0x280] sm:$0xff]
    %v169 = vld [vmem:[#allocation5 + $0x288] sm:$0xff]
    %v170 = vld [vmem:[#allocation5 + $0x290] sm:$0xff]
    %v171 = vld [vmem:[#allocation5 + $0x298] sm:$0xff]
    %v172 = vld [vmem:[#allocation5 + $0x2a0] sm:$0xff]
    %v173 = vld [vmem:[#allocation5 + $0x2a8] sm:$0xff]
    %v174 = vld [vmem:[#allocation5 + $0x2b0] sm:$0xff]
    %v175 = vld [vmem:[#allocation5 + $0x2b8] sm:$0xff]
    %v176 = vld [vmem:[#allocation5 + $0x2c0] sm:$0xff]
    %v177 = vld [vmem:[#allocation5 + $0x2c8] sm:$0xff]
    %v178 = vld [vmem:[#allocation5 + $0x2d0] sm:$0xff]
    %v179 = vld [vmem:[#allocation5 + $0x2d8] sm:$0xff]
    %v180 = vld [vmem:[#allocation5 + $0x2e0] sm:$0xff]
    %v181 = vld [vmem:[#allocation5 + $0x2e8] sm:$0xff]
    %v182 = vld [vmem:[#allocation5 + $0x2f0] sm:$0xff]
    %v183 = vld [vmem:[#allocation5 + $0x2f8] sm:$0xff]
    %v184 = vld [vmem:[#allocation5 + $0x300] sm:$0xff]
    %v185 = vld [vmem:[#allocation5 + $0x308] sm:$0xff]
    %v186 = vld [vmem:[#allocation5 + $0x310] sm:$0xff]
    %v187 = vld [vmem:[#allocation5 + $0x318] sm:$0xff]
    %v188 = vld [vmem:[#allocation5 + $0x320] sm:$0xff]
    %v189 = vld [vmem:[#allocation5 + $0x328] sm:$0xff]
    %v190 = vld [vmem:[#allocation5 + $0x330] sm:$0xff]
    %v191 = vld [vmem:[#allocation5 + $0x338] sm:$0xff]
    %v192 = vld [vmem:[#allocation5 + $0x340] sm:$0xff]
    %v193 = vld [vmem:[#allocation5 + $0x348] sm:$0xff]
    %v194 = vld [vmem:[#allocation5 + $0x350] sm:$0xff]
    %v195 = vld [vmem:[#allocation5 + $0x358] sm:$0xff]
    %v196 = vld [vmem:[#allocation5 + $0x360] sm:$0xff]
    %v197 = vld [vmem:[#allocation5 + $0x368] sm:$0xff]
    %v198 = vld [vmem:[#allocation5 + $0x370] sm:$0xff]
    %v199 = vld [vmem:[#allocation5 + $0x378] sm:$0xff]
    %v200 = vld [vmem:[#allocation5 + $0x380] sm:$0xff]
    %v201 = vld [vmem:[#allocation5 + $0x388] sm:$0xff]
    %v202 = vld [vmem:[#allocation5 + $0x390] sm:$0xff]
    %v203 = vld [vmem:[#allocation5 + $0x398] sm:$0xff]
    %v204 = vld [vmem:[#allocation5 + $0x3a0] sm:$0xff]
    %v205 = vld [vmem:[#allocation5 + $0x3a8] sm:$0xff]
    %v206 = vld [vmem:[#allocation5 + $0x3b0] sm:$0xff]
    %v207 = vld [vmem:[#allocation5 + $0x3b8] sm:$0xff]
    %v208 = vld [vmem:[#allocation5 + $0x3c0] sm:$0xff]
    %v209 = vld [vmem:[#allocation5 + $0x3c8] sm:$0xff]
    %v210 = vld [vmem:[#allocation5 + $0x3d0] sm:$0xff]
    %v211 = vld [vmem:[#allocation5 + $0x3d8] sm:$0xff]
    %v212 = vld [vmem:[#allocation5 + $0x3e0] sm:$0xff]
    %v213 = vld [vmem:[#allocation5 + $0x3e8] sm:$0xff]
    %v214 = vld [vmem:[#allocation5 + $0x3f0] sm:$0xff]
    %v215 = vld [vmem:[#allocation5 + $0x3f8] sm:$0xff]
    %v216 = vld [vmem:[#allocation7] sm:$0xff]
    %v218 = vperm.slane %v216, 0
    %v219 = vperm.slane %v216, 1
    %v220 = vperm.slane %v216, 2
    %v221 = vperm.slane %v216, 3
    %v222 = vperm.slane %v216, 4
    %v223 = vperm.slane %v216, 5
    %v224 = vperm.slane %v216, 6
    %v225 = vperm.slane %v216, 7
    %v362 = vunpack.c.l.b16 %v88
    %v363 = vunpack.c.h.b16 %v88
    %v364 = vunpack.c.l.b16 %v89
    %v365 = vunpack.c.h.b16 %v89
    %v366 = vunpack.c.l.b16 %v90
    %v367 = vunpack.c.h.b16 %v90
    %v368 = vunpack.c.l.b16 %v91
    %v369 = vunpack.c.h.b16 %v91
    %v370 = vunpack.c.l.b16 %v92
    %v371 = vunpack.c.h.b16 %v92
    %v372 = vunpack.c.l.b16 %v93
    %v373 = vunpack.c.h.b16 %v93
    %v374 = vunpack.c.l.b16 %v94
    %v375 = vunpack.c.h.b16 %v94
    %v376 = vunpack.c.l.b16 %v95
    %v377 = vunpack.c.h.b16 %v95
    %v378 = vunpack.c.l.b16 %v96
    %v379 = vunpack.c.h.b16 %v96
    %v380 = vunpack.c.l.b16 %v97
    %v381 = vunpack.c.h.b16 %v97
    %v382 = vunpack.c.l.b16 %v98
    %v383 = vunpack.c.h.b16 %v98
    %v384 = vunpack.c.l.b16 %v99
    %v385 = vunpack.c.h.b16 %v99
    %v386 = vunpack.c.l.b16 %v100
    %v387 = vunpack.c.h.b16 %v100
    %v388 = vunpack.c.l.b16 %v101
    %v389 = vunpack.c.h.b16 %v101
    %v390 = vunpack.c.l.b16 %v102
    %v391 = vunpack.c.h.b16 %v102
    %v392 = vunpack.c.l.b16 %v103
    %v393 = vunpack.c.h.b16 %v103
    %v394 = vunpack.c.l.b16 %v104
    %v395 = vunpack.c.h.b16 %v104
    %v396 = vunpack.c.l.b16 %v105
    %v397 = vunpack.c.h.b16 %v105
    %v398 = vunpack.c.l.b16 %v106
    %v399 = vunpack.c.h.b16 %v106
    %v400 = vunpack.c.l.b16 %v107
    %v401 = vunpack.c.h.b16 %v107
    %v402 = vunpack.c.l.b16 %v108
    %v403 = vunpack.c.h.b16 %v108
    %v404 = vunpack.c.l.b16 %v109
    %v405 = vunpack.c.h.b16 %v109
    %v406 = vunpack.c.l.b16 %v110
    %v407 = vunpack.c.h.b16 %v110
    %v408 = vunpack.c.l.b16 %v111
    %v409 = vunpack.c.h.b16 %v111
    %v410 = vunpack.c.l.b16 %v112
    %v411 = vunpack.c.h.b16 %v112
    %v412 = vunpack.c.l.b16 %v113
    %v413 = vunpack.c.h.b16 %v113
    %v414 = vunpack.c.l.b16 %v114
    %v415 = vunpack.c.h.b16 %v114
    %v416 = vunpack.c.l.b16 %v115
    %v417 = vunpack.c.h.b16 %v115
    %v418 = vunpack.c.l.b16 %v116
    %v419 = vunpack.c.h.b16 %v116
    %v420 = vunpack.c.l.b16 %v117
    %v421 = vunpack.c.h.b16 %v117
    %v422 = vunpack.c.l.b16 %v118
    %v423 = vunpack.c.h.b16 %v118
    %v424 = vunpack.c.l.b16 %v119
    %v425 = vunpack.c.h.b16 %v119
    %v426 = vunpack.c.l.b16 %v120
    %v427 = vunpack.c.h.b16 %v120
    %v428 = vunpack.c.l.b16 %v121
    %v429 = vunpack.c.h.b16 %v121
    %v430 = vunpack.c.l.b16 %v122
    %v431 = vunpack.c.h.b16 %v122
    %v432 = vunpack.c.l.b16 %v123
    %v433 = vunpack.c.h.b16 %v123
    %v434 = vunpack.c.l.b16 %v124
    %v435 = vunpack.c.h.b16 %v124
    %v436 = vunpack.c.l.b16 %v125
    %v437 = vunpack.c.h.b16 %v125
    %v438 = vunpack.c.l.b16 %v126
    %v439 = vunpack.c.h.b16 %v126
    %v440 = vunpack.c.l.b16 %v127
    %v441 = vunpack.c.h.b16 %v127
    %v442 = vunpack.c.l.b16 %v128
    %v443 = vunpack.c.h.b16 %v128
    %v444 = vunpack.c.l.b16 %v129
    %v445 = vunpack.c.h.b16 %v129
    %v446 = vunpack.c.l.b16 %v130
    %v447 = vunpack.c.h.b16 %v130
    %v448 = vunpack.c.l.b16 %v131
    %v449 = vunpack.c.h.b16 %v131
    %v450 = vunpack.c.l.b16 %v132
    %v451 = vunpack.c.h.b16 %v132
    %v452 = vunpack.c.l.b16 %v133
    %v453 = vunpack.c.h.b16 %v133
    %v454 = vunpack.c.l.b16 %v134
    %v455 = vunpack.c.h.b16 %v134
    %v456 = vunpack.c.l.b16 %v135
    %v457 = vunpack.c.h.b16 %v135
    %v458 = vunpack.c.l.b16 %v136
    %v459 = vunpack.c.h.b16 %v136
    %v460 = vunpack.c.l.b16 %v137
    %v461 = vunpack.c.h.b16 %v137
    %v462 = vunpack.c.l.b16 %v138
    %v463 = vunpack.c.h.b16 %v138
    %v464 = vunpack.c.l.b16 %v139
    %v465 = vunpack.c.h.b16 %v139
    %v466 = vunpack.c.l.b16 %v140
    %v467 = vunpack.c.h.b16 %v140
    %v468 = vunpack.c.l.b16 %v141
    %v469 = vunpack.c.h.b16 %v141
    %v470 = vunpack.c.l.b16 %v142
    %v471 = vunpack.c.h.b16 %v142
    %v472 = vunpack.c.l.b16 %v143
    %v473 = vunpack.c.h.b16 %v143
    %v474 = vunpack.c.l.b16 %v144
    %v475 = vunpack.c.h.b16 %v144
    %v476 = vunpack.c.l.b16 %v145
    %v477 = vunpack.c.h.b16 %v145
    %v478 = vunpack.c.l.b16 %v146
    %v479 = vunpack.c.h.b16 %v146
    %v480 = vunpack.c.l.b16 %v147
    %v481 = vunpack.c.h.b16 %v147
    %v482 = vunpack.c.l.b16 %v148
    %v483 = vunpack.c.h.b16 %v148
    %v484 = vunpack.c.l.b16 %v149
    %v485 = vunpack.c.h.b16 %v149
    %v486 = vunpack.c.l.b16 %v150
    %v487 = vunpack.c.h.b16 %v150
    %v488 = vunpack.c.l.b16 %v151
    %v489 = vunpack.c.h.b16 %v151
    %v490 = vunpack.c.l.b16 %v152
    %v491 = vunpack.c.h.b16 %v152
    %v492 = vunpack.c.l.b16 %v153
    %v493 = vunpack.c.h.b16 %v153
    %v494 = vunpack.c.l.b16 %v154
    %v495 = vunpack.c.h.b16 %v154
    %v496 = vunpack.c.l.b16 %v155
    %v497 = vunpack.c.h.b16 %v155
    %v498 = vunpack.c.l.b16 %v156
    %v499 = vunpack.c.h.b16 %v156
    %v500 = vunpack.c.l.b16 %v157
    %v501 = vunpack.c.h.b16 %v157
    %v502 = vunpack.c.l.b16 %v158
    %v503 = vunpack.c.h.b16 %v158
    %v504 = vunpack.c.l.b16 %v159
    %v505 = vunpack.c.h.b16 %v159
    %v506 = vunpack.c.l.b16 %v160
    %v507 = vunpack.c.h.b16 %v160
    %v508 = vunpack.c.l.b16 %v161
    %v509 = vunpack.c.h.b16 %v161
    %v510 = vunpack.c.l.b16 %v162
    %v511 = vunpack.c.h.b16 %v162
    %v512 = vunpack.c.l.b16 %v163
    %v513 = vunpack.c.h.b16 %v163
    %v514 = vunpack.c.l.b16 %v164
    %v515 = vunpack.c.h.b16 %v164
    %v516 = vunpack.c.l.b16 %v165
    %v517 = vunpack.c.h.b16 %v165
    %v518 = vunpack.c.l.b16 %v166
    %v519 = vunpack.c.h.b16 %v166
    %v520 = vunpack.c.l.b16 %v167
    %v521 = vunpack.c.h.b16 %v167
    %v522 = vunpack.c.l.b16 %v168
    %v523 = vunpack.c.h.b16 %v168
    %v524 = vunpack.c.l.b16 %v169
    %v525 = vunpack.c.h.b16 %v169
    %v526 = vunpack.c.l.b16 %v170
    %v527 = vunpack.c.h.b16 %v170
    %v528 = vunpack.c.l.b16 %v171
    %v529 = vunpack.c.h.b16 %v171
    %v530 = vunpack.c.l.b16 %v172
    %v531 = vunpack.c.h.b16 %v172
    %v532 = vunpack.c.l.b16 %v173
    %v533 = vunpack.c.h.b16 %v173
    %v534 = vunpack.c.l.b16 %v174
    %v535 = vunpack.c.h.b16 %v174
    %v536 = vunpack.c.l.b16 %v175
    %v537 = vunpack.c.h.b16 %v175
    %v538 = vunpack.c.l.b16 %v176
    %v539 = vunpack.c.h.b16 %v176
    %v540 = vunpack.c.l.b16 %v177
    %v541 = vunpack.c.h.b16 %v177
    %v542 = vunpack.c.l.b16 %v178
    %v543 = vunpack.c.h.b16 %v178
    %v544 = vunpack.c.l.b16 %v179
    %v545 = vunpack.c.h.b16 %v179
    %v546 = vunpack.c.l.b16 %v180
    %v547 = vunpack.c.h.b16 %v180
    %v548 = vunpack.c.l.b16 %v181
    %v549 = vunpack.c.h.b16 %v181
    %v550 = vunpack.c.l.b16 %v182
    %v551 = vunpack.c.h.b16 %v182
    %v552 = vunpack.c.l.b16 %v183
    %v553 = vunpack.c.h.b16 %v183
    %v554 = vunpack.c.l.b16 %v184
    %v555 = vunpack.c.h.b16 %v184
    %v556 = vunpack.c.l.b16 %v185
    %v557 = vunpack.c.h.b16 %v185
    %v558 = vunpack.c.l.b16 %v186
    %v559 = vunpack.c.h.b16 %v186
    %v560 = vunpack.c.l.b16 %v187
    %v561 = vunpack.c.h.b16 %v187
    %v562 = vunpack.c.l.b16 %v188
    %v563 = vunpack.c.h.b16 %v188
    %v564 = vunpack.c.l.b16 %v189
    %v565 = vunpack.c.h.b16 %v189
    %v566 = vunpack.c.l.b16 %v190
    %v567 = vunpack.c.h.b16 %v190
    %v568 = vunpack.c.l.b16 %v191
    %v569 = vunpack.c.h.b16 %v191
    %v570 = vunpack.c.l.b16 %v192
    %v571 = vunpack.c.h.b16 %v192
    %v572 = vunpack.c.l.b16 %v193
    %v573 = vunpack.c.h.b16 %v193
    %v574 = vunpack.c.l.b16 %v194
    %v575 = vunpack.c.h.b16 %v194
    %v576 = vunpack.c.l.b16 %v195
    %v577 = vunpack.c.h.b16 %v195
    %v578 = vunpack.c.l.b16 %v196
    %v579 = vunpack.c.h.b16 %v196
    %v580 = vunpack.c.l.b16 %v197
    %v581 = vunpack.c.h.b16 %v197
    %v582 = vunpack.c.l.b16 %v198
    %v583 = vunpack.c.h.b16 %v198
    %v584 = vunpack.c.l.b16 %v199
    %v585 = vunpack.c.h.b16 %v199
    %v586 = vunpack.c.l.b16 %v200
    %v587 = vunpack.c.h.b16 %v200
    %v588 = vunpack.c.l.b16 %v201
    %v589 = vunpack.c.h.b16 %v201
    %v590 = vunpack.c.l.b16 %v202
    %v591 = vunpack.c.h.b16 %v202
    %v592 = vunpack.c.l.b16 %v203
    %v593 = vunpack.c.h.b16 %v203
    %v594 = vunpack.c.l.b16 %v204
    %v595 = vunpack.c.h.b16 %v204
    %v596 = vunpack.c.l.b16 %v205
    %v597 = vunpack.c.h.b16 %v205
    %v598 = vunpack.c.l.b16 %v206
    %v599 = vunpack.c.h.b16 %v206
    %v600 = vunpack.c.l.b16 %v207
    %v601 = vunpack.c.h.b16 %v207
    %v602 = vunpack.c.l.b16 %v208
    %v603 = vunpack.c.h.b16 %v208
    %v604 = vunpack.c.l.b16 %v209
    %v605 = vunpack.c.h.b16 %v209
    %v606 = vunpack.c.l.b16 %v210
    %v607 = vunpack.c.h.b16 %v210
    %v608 = vunpack.c.l.b16 %v211
    %v609 = vunpack.c.h.b16 %v211
    %v610 = vunpack.c.l.b16 %v212
    %v611 = vunpack.c.h.b16 %v212
    %v612 = vunpack.c.l.b16 %v213
    %v613 = vunpack.c.h.b16 %v213
    %v614 = vunpack.c.l.b16 %v214
    %v615 = vunpack.c.h.b16 %v214
    %v616 = vunpack.c.l.b16 %v215
    %v617 = vunpack.c.h.b16 %v215
    %v618 = vpack.c.b16 %v370, %v362
    %v619 = vpack.c.b16 %v371, %v363
    %v620 = vpack.c.b16 %v372, %v364
    %v621 = vpack.c.b16 %v373, %v365
    %v622 = vpack.c.b16 %v374, %v366
    %v623 = vpack.c.b16 %v375, %v367
    %v624 = vpack.c.b16 %v376, %v368
    %v625 = vpack.c.b16 %v377, %v369
    %v626 = vpack.c.b16 %v386, %v378
    %v627 = vpack.c.b16 %v387, %v379
    %v628 = vpack.c.b16 %v388, %v380
    %v629 = vpack.c.b16 %v389, %v381
    %v630 = vpack.c.b16 %v390, %v382
    %v631 = vpack.c.b16 %v391, %v383
    %v632 = vpack.c.b16 %v392, %v384
    %v633 = vpack.c.b16 %v393, %v385
    %v634 = vpack.c.b16 %v402, %v394
    %v635 = vpack.c.b16 %v403, %v395
    %v636 = vpack.c.b16 %v404, %v396
    %v637 = vpack.c.b16 %v405, %v397
    %v638 = vpack.c.b16 %v406, %v398
    %v639 = vpack.c.b16 %v407, %v399
    %v640 = vpack.c.b16 %v408, %v400
    %v641 = vpack.c.b16 %v409, %v401
    %v642 = vpack.c.b16 %v418, %v410
    %v643 = vpack.c.b16 %v419, %v411
    %v644 = vpack.c.b16 %v420, %v412
    %v645 = vpack.c.b16 %v421, %v413
    %v646 = vpack.c.b16 %v422, %v414
    %v647 = vpack.c.b16 %v423, %v415
    %v648 = vpack.c.b16 %v424, %v416
    %v649 = vpack.c.b16 %v425, %v417
    %v650 = vpack.c.b16 %v434, %v426
    %v651 = vpack.c.b16 %v435, %v427
    %v652 = vpack.c.b16 %v436, %v428
    %v653 = vpack.c.b16 %v437, %v429
    %v654 = vpack.c.b16 %v438, %v430
    %v655 = vpack.c.b16 %v439, %v431
    %v656 = vpack.c.b16 %v440, %v432
    %v657 = vpack.c.b16 %v441, %v433
    %v658 = vpack.c.b16 %v450, %v442
    %v659 = vpack.c.b16 %v451, %v443
    %v660 = vpack.c.b16 %v452, %v444
    %v661 = vpack.c.b16 %v453, %v445
    %v662 = vpack.c.b16 %v454, %v446
    %v663 = vpack.c.b16 %v455, %v447
    %v664 = vpack.c.b16 %v456, %v448
    %v665 = vpack.c.b16 %v457, %v449
    %v666 = vpack.c.b16 %v466, %v458
    %v667 = vpack.c.b16 %v467, %v459
    %v668 = vpack.c.b16 %v468, %v460
    %v669 = vpack.c.b16 %v469, %v461
    %v670 = vpack.c.b16 %v470, %v462
    %v671 = vpack.c.b16 %v471, %v463
    %v672 = vpack.c.b16 %v472, %v464
    %v673 = vpack.c.b16 %v473, %v465
    %v674 = vpack.c.b16 %v482, %v474
    %v675 = vpack.c.b16 %v483, %v475
    %v676 = vpack.c.b16 %v484, %v476
    %v677 = vpack.c.b16 %v485, %v477
    %v678 = vpack.c.b16 %v486, %v478
    %v679 = vpack.c.b16 %v487, %v479
    %v680 = vpack.c.b16 %v488, %v480
    %v681 = vpack.c.b16 %v489, %v481
    %v682 = vpack.c.b16 %v498, %v490
    %v683 = vpack.c.b16 %v499, %v491
    %v684 = vpack.c.b16 %v500, %v492
    %v685 = vpack.c.b16 %v501, %v493
    %v686 = vpack.c.b16 %v502, %v494
    %v687 = vpack.c.b16 %v503, %v495
    %v688 = vpack.c.b16 %v504, %v496
    %v689 = vpack.c.b16 %v505, %v497
    %v690 = vpack.c.b16 %v514, %v506
    %v691 = vpack.c.b16 %v515, %v507
    %v692 = vpack.c.b16 %v516, %v508
    %v693 = vpack.c.b16 %v517, %v509
    %v694 = vpack.c.b16 %v518, %v510
    %v695 = vpack.c.b16 %v519, %v511
    %v696 = vpack.c.b16 %v520, %v512
    %v697 = vpack.c.b16 %v521, %v513
    %v698 = vpack.c.b16 %v530, %v522
    %v699 = vpack.c.b16 %v531, %v523
    %v700 = vpack.c.b16 %v532, %v524
    %v701 = vpack.c.b16 %v533, %v525
    %v702 = vpack.c.b16 %v534, %v526
    %v703 = vpack.c.b16 %v535, %v527
    %v704 = vpack.c.b16 %v536, %v528
    %v705 = vpack.c.b16 %v537, %v529
    %v706 = vpack.c.b16 %v546, %v538
    %v707 = vpack.c.b16 %v547, %v539
    %v708 = vpack.c.b16 %v548, %v540
    %v709 = vpack.c.b16 %v549, %v541
    %v710 = vpack.c.b16 %v550, %v542
    %v711 = vpack.c.b16 %v551, %v543
    %v712 = vpack.c.b16 %v552, %v544
    %v713 = vpack.c.b16 %v553, %v545
    %v714 = vpack.c.b16 %v562, %v554
    %v715 = vpack.c.b16 %v563, %v555
    %v716 = vpack.c.b16 %v564, %v556
    %v717 = vpack.c.b16 %v565, %v557
    %v718 = vpack.c.b16 %v566, %v558
    %v719 = vpack.c.b16 %v567, %v559
    %v720 = vpack.c.b16 %v568, %v560
    %v721 = vpack.c.b16 %v569, %v561
    %v722 = vpack.c.b16 %v578, %v570
    %v723 = vpack.c.b16 %v579, %v571
    %v724 = vpack.c.b16 %v580, %v572
    %v725 = vpack.c.b16 %v581, %v573
    %v726 = vpack.c.b16 %v582, %v574
    %v727 = vpack.c.b16 %v583, %v575
    %v728 = vpack.c.b16 %v584, %v576
    %v729 = vpack.c.b16 %v585, %v577
    %v730 = vpack.c.b16 %v594, %v586
    %v731 = vpack.c.b16 %v595, %v587
    %v732 = vpack.c.b16 %v596, %v588
    %v733 = vpack.c.b16 %v597, %v589
    %v734 = vpack.c.b16 %v598, %v590
    %v735 = vpack.c.b16 %v599, %v591
    %v736 = vpack.c.b16 %v600, %v592
    %v737 = vpack.c.b16 %v601, %v593
    %v738 = vpack.c.b16 %v610, %v602
    %v739 = vpack.c.b16 %v611, %v603
    %v740 = vpack.c.b16 %v612, %v604
    %v741 = vpack.c.b16 %v613, %v605
    %v742 = vpack.c.b16 %v614, %v606
    %v743 = vpack.c.b16 %v615, %v607
    %v744 = vpack.c.b16 %v616, %v608
    %v745 = vpack.c.b16 %v617, %v609
    %874 = vmatpush.bf16.msra.mxu0 %v674
    %875 = vmatpush.bf16.msra.mxu0 %v666
    %876 = vmatpush.bf16.msra.mxu0 %v658
    %877 = vmatpush.bf16.msra.mxu0 %v650
    %878 = vmatpush.bf16.msra.mxu0 %v642
    %879 = vmatpush.bf16.msra.mxu0 %v634
    %880 = vmatpush.bf16.msra.mxu0 %v626
    %881 = vmatpush.bf16.msra.mxu0 %v618
    %882 = vmatmul.bf16.gmra.mxu0 %v86
    %v883 = vpop.f32.mrf.mxu0
    %v884 = vadd.f32 %v218, %v883
    %v885 = vpop.f32.mrf.mxu0
    %v886 = vadd.f32 %v218, %v885
    %887 = vdwg.mxu0
    %888 = vmatpush.bf16.msra.mxu0 %v738
    %889 = vmatpush.bf16.msra.mxu0 %v730
    %890 = vmatpush.bf16.msra.mxu0 %v722
    %891 = vmatpush.bf16.msra.mxu0 %v714
    %892 = vmatpush.bf16.msra.mxu0 %v706
    %893 = vmatpush.bf16.msra.mxu0 %v698
    %894 = vmatpush.bf16.msra.mxu0 %v690
    %895 = vmatpush.bf16.msra.mxu0 %v682
    %896 = vmatmul.bf16.gmra.mxu0 %v87
    %v897 = vpop.f32.mrf.mxu0
    %v898 = vadd.f32 %v884, %v897
    %v899 = vpop.f32.mrf.mxu0
    %v900 = vadd.f32 %v886, %v899
    %901 = vdwg.mxu0
    %902 = vmatpush.bf16.msra.mxu0 %v675
    %903 = vmatpush.bf16.msra.mxu0 %v667
    %904 = vmatpush.bf16.msra.mxu0 %v659
    %905 = vmatpush.bf16.msra.mxu0 %v651
    %906 = vmatpush.bf16.msra.mxu0 %v643
    %907 = vmatpush.bf16.msra.mxu0 %v635
    %908 = vmatpush.bf16.msra.mxu0 %v627
    %909 = vmatpush.bf16.msra.mxu0 %v619
    %910 = vmatmul.bf16.gmra.mxu0 %v86
    %v911 = vpop.f32.mrf.mxu0
    %v912 = vadd.f32 %v219, %v911
    %v913 = vpop.f32.mrf.mxu0
    %v914 = vadd.f32 %v219, %v913
    %915 = vdwg.mxu0
    %916 = vmatpush.bf16.msra.mxu0 %v739
    %917 = vmatpush.bf16.msra.mxu0 %v731
    %918 = vmatpush.bf16.msra.mxu0 %v723
    %919 = vmatpush.bf16.msra.mxu0 %v715
    %920 = vmatpush.bf16.msra.mxu0 %v707
    %921 = vmatpush.bf16.msra.mxu0 %v699
    %922 = vmatpush.bf16.msra.mxu0 %v691
    %923 = vmatpush.bf16.msra.mxu0 %v683
    %924 = vmatmul.bf16.gmra.mxu0 %v87
    %v925 = vpop.f32.mrf.mxu0
    %v926 = vadd.f32 %v912, %v925
    %v927 = vpop.f32.mrf.mxu0
    %v928 = vadd.f32 %v914, %v927
    %929 = vdwg.mxu0
    %930 = vmatpush.bf16.msra.mxu0 %v676
    %931 = vmatpush.bf16.msra.mxu0 %v668
    %932 = vmatpush.bf16.msra.mxu0 %v660
    %933 = vmatpush.bf16.msra.mxu0 %v652
    %934 = vmatpush.bf16.msra.mxu0 %v644
    %935 = vmatpush.bf16.msra.mxu0 %v636
    %936 = vmatpush.bf16.msra.mxu0 %v628
    %937 = vmatpush.bf16.msra.mxu0 %v620
    %938 = vmatmul.bf16.gmra.mxu0 %v86
    %v939 = vpop.f32.mrf.mxu0
    %v940 = vadd.f32 %v220, %v939
    %v941 = vpop.f32.mrf.mxu0
    %v942 = vadd.f32 %v220, %v941
    %943 = vdwg.mxu0
    %944 = vmatpush.bf16.msra.mxu0 %v740
    %945 = vmatpush.bf16.msra.mxu0 %v732
    %946 = vmatpush.bf16.msra.mxu0 %v724
    %947 = vmatpush.bf16.msra.mxu0 %v716
    %948 = vmatpush.bf16.msra.mxu0 %v708
    %949 = vmatpush.bf16.msra.mxu0 %v700
    %950 = vmatpush.bf16.msra.mxu0 %v692
    %951 = vmatpush.bf16.msra.mxu0 %v684
    %952 = vmatmul.bf16.gmra.mxu0 %v87
    %v953 = vpop.f32.mrf.mxu0
    %v954 = vadd.f32 %v940, %v953
    %v955 = vpop.f32.mrf.mxu0
    %v956 = vadd.f32 %v942, %v955
    %957 = vdwg.mxu0
    %958 = vmatpush.bf16.msra.mxu0 %v677
    %959 = vmatpush.bf16.msra.mxu0 %v669
    %960 = vmatpush.bf16.msra.mxu0 %v661
    %961 = vmatpush.bf16.msra.mxu0 %v653
    %962 = vmatpush.bf16.msra.mxu0 %v645
    %963 = vmatpush.bf16.msra.mxu0 %v637
    %964 = vmatpush.bf16.msra.mxu0 %v629
    %965 = vmatpush.bf16.msra.mxu0 %v621
    %966 = vmatmul.bf16.gmra.mxu0 %v86
    %v967 = vpop.f32.mrf.mxu0
    %v968 = vadd.f32 %v221, %v967
    %v969 = vpop.f32.mrf.mxu0
    %v970 = vadd.f32 %v221, %v969
    %971 = vdwg.mxu0
    %972 = vmatpush.bf16.msra.mxu0 %v741
    %973 = vmatpush.bf16.msra.mxu0 %v733
    %974 = vmatpush.bf16.msra.mxu0 %v725
    %975 = vmatpush.bf16.msra.mxu0 %v717
    %976 = vmatpush.bf16.msra.mxu0 %v709
    %977 = vmatpush.bf16.msra.mxu0 %v701
    %978 = vmatpush.bf16.msra.mxu0 %v693
    %979 = vmatpush.bf16.msra.mxu0 %v685
    %980 = vmatmul.bf16.gmra.mxu0 %v87
    %v981 = vpop.f32.mrf.mxu0
    %v982 = vadd.f32 %v968, %v981
    %v983 = vpop.f32.mrf.mxu0
    %v984 = vadd.f32 %v970, %v983
    %985 = vdwg.mxu0
    %986 = vmatpush.bf16.msra.mxu0 %v678
    %987 = vmatpush.bf16.msra.mxu0 %v670
    %988 = vmatpush.bf16.msra.mxu0 %v662
    %989 = vmatpush.bf16.msra.mxu0 %v654
    %990 = vmatpush.bf16.msra.mxu0 %v646
    %991 = vmatpush.bf16.msra.mxu0 %v638
    %992 = vmatpush.bf16.msra.mxu0 %v630
    %993 = vmatpush.bf16.msra.mxu0 %v622
    %994 = vmatmul.bf16.gmra.mxu0 %v86
    %v995 = vpop.f32.mrf.mxu0
    %v996 = vadd.f32 %v222, %v995
    %v997 = vpop.f32.mrf.mxu0
    %v998 = vadd.f32 %v222, %v997
    %999 = vdwg.mxu0
    %1000 = vmatpush.bf16.msra.mxu0 %v742
    %1001 = vmatpush.bf16.msra.mxu0 %v734
    %1002 = vmatpush.bf16.msra.mxu0 %v726
    %1003 = vmatpush.bf16.msra.mxu0 %v718
    %1004 = vmatpush.bf16.msra.mxu0 %v710
    %1005 = vmatpush.bf16.msra.mxu0 %v702
    %1006 = vmatpush.bf16.msra.mxu0 %v694
    %1007 = vmatpush.bf16.msra.mxu0 %v686
    %1008 = vmatmul.bf16.gmra.mxu0 %v87
    %v1009 = vpop.f32.mrf.mxu0
    %v1010 = vadd.f32 %v996, %v1009
    %v1011 = vpop.f32.mrf.mxu0
    %v1012 = vadd.f32 %v998, %v1011
    %1013 = vdwg.mxu0
    %1014 = vmatpush.bf16.msra.mxu0 %v679
    %1015 = vmatpush.bf16.msra.mxu0 %v671
    %1016 = vmatpush.bf16.msra.mxu0 %v663
    %1017 = vmatpush.bf16.msra.mxu0 %v655
    %1018 = vmatpush.bf16.msra.mxu0 %v647
    %1019 = vmatpush.bf16.msra.mxu0 %v639
    %1020 = vmatpush.bf16.msra.mxu0 %v631
    %1021 = vmatpush.bf16.msra.mxu0 %v623
    %1022 = vmatmul.bf16.gmra.mxu0 %v86
    %v1023 = vpop.f32.mrf.mxu0
    %v1024 = vadd.f32 %v223, %v1023
    %v1025 = vpop.f32.mrf.mxu0
    %v1026 = vadd.f32 %v223, %v1025
    %1027 = vdwg.mxu0
    %1028 = vmatpush.bf16.msra.mxu0 %v743
    %1029 = vmatpush.bf16.msra.mxu0 %v735
    %1030 = vmatpush.bf16.msra.mxu0 %v727
    %1031 = vmatpush.bf16.msra.mxu0 %v719
    %1032 = vmatpush.bf16.msra.mxu0 %v711
    %1033 = vmatpush.bf16.msra.mxu0 %v703
    %1034 = vmatpush.bf16.msra.mxu0 %v695
    %1035 = vmatpush.bf16.msra.mxu0 %v687
    %1036 = vmatmul.bf16.gmra.mxu0 %v87
    %v1037 = vpop.f32.mrf.mxu0
    %v1038 = vadd.f32 %v1024, %v1037
    %v1039 = vpop.f32.mrf.mxu0
    %v1040 = vadd.f32 %v1026, %v1039
    %1041 = vdwg.mxu0
    %1042 = vmatpush.bf16.msra.mxu0 %v680
    %1043 = vmatpush.bf16.msra.mxu0 %v672
    %1044 = vmatpush.bf16.msra.mxu0 %v664
    %1045 = vmatpush.bf16.msra.mxu0 %v656
    %1046 = vmatpush.bf16.msra.mxu0 %v648
    %1047 = vmatpush.bf16.msra.mxu0 %v640
    %1048 = vmatpush.bf16.msra.mxu0 %v632
    %1049 = vmatpush.bf16.msra.mxu0 %v624
    %1050 = vmatmul.bf16.gmra.mxu0 %v86
    %v1051 = vpop.f32.mrf.mxu0
    %v1052 = vadd.f32 %v224, %v1051
    %v1053 = vpop.f32.mrf.mxu0
    %v1054 = vadd.f32 %v224, %v1053
    %1055 = vdwg.mxu0
    %1056 = vmatpush.bf16.msra.mxu0 %v744
    %1057 = vmatpush.bf16.msra.mxu0 %v736
    %1058 = vmatpush.bf16.msra.mxu0 %v728
    %1059 = vmatpush.bf16.msra.mxu0 %v720
    %1060 = vmatpush.bf16.msra.mxu0 %v712
    %1061 = vmatpush.bf16.msra.mxu0 %v704
    %1062 = vmatpush.bf16.msra.mxu0 %v696
    %1063 = vmatpush.bf16.msra.mxu0 %v688
    %1064 = vmatmul.bf16.gmra.mxu0 %v87
    %v1065 = vpop.f32.mrf.mxu0
    %v1066 = vadd.f32 %v1052, %v1065
    %v1067 = vpop.f32.mrf.mxu0
    %v1068 = vadd.f32 %v1054, %v1067
    %1069 = vdwg.mxu0
    %1070 = vmatpush.bf16.msra.mxu0 %v681
    %1071 = vmatpush.bf16.msra.mxu0 %v673
    %1072 = vmatpush.bf16.msra.mxu0 %v665
    %1073 = vmatpush.bf16.msra.mxu0 %v657
    %1074 = vmatpush.bf16.msra.mxu0 %v649
    %1075 = vmatpush.bf16.msra.mxu0 %v641
    %1076 = vmatpush.bf16.msra.mxu0 %v633
    %1077 = vmatpush.bf16.msra.mxu0 %v625
    %1078 = vmatmul.bf16.gmra.mxu0 %v86
    %v1079 = vpop.f32.mrf.mxu0
    %v1080 = vadd.f32 %v225, %v1079
    %v1081 = vpop.f32.mrf.mxu0
    %v1082 = vadd.f32 %v225, %v1081
    %1083 = vdwg.mxu0
    %1084 = vmatpush.bf16.msra.mxu0 %v745
    %1085 = vmatpush.bf16.msra.mxu0 %v737
    %1086 = vmatpush.bf16.msra.mxu0 %v729
    %1087 = vmatpush.bf16.msra.mxu0 %v721
    %1088 = vmatpush.bf16.msra.mxu0 %v713
    %1089 = vmatpush.bf16.msra.mxu0 %v705
    %1090 = vmatpush.bf16.msra.mxu0 %v697
    %1091 = vmatpush.bf16.msra.mxu0 %v689
    %1092 = vmatmul.bf16.gmra.mxu0 %v87
    %v1093 = vpop.f32.mrf.mxu0
    %v1094 = vadd.f32 %v1080, %v1093
    %v1095 = vpop.f32.mrf.mxu0
    %v1096 = vadd.f32 %v1082, %v1095
    %1097 = vdwg.mxu0
    %v1098 = vmax.f32 %v898, 0.0
    %v1099 = vmax.f32 %v926, 0.0
    %v1100 = vmax.f32 %v954, 0.0
    %v1101 = vmax.f32 %v982, 0.0
    %v1102 = vmax.f32 %v1010, 0.0
    %v1103 = vmax.f32 %v1038, 0.0
    %v1104 = vmax.f32 %v1066, 0.0
    %v1105 = vmax.f32 %v1094, 0.0
    %v1106 = vmax.f32 %v900, 0.0
    %v1107 = vmax.f32 %v928, 0.0
    %v1108 = vmax.f32 %v956, 0.0
    %v1109 = vmax.f32 %v984, 0.0
    %v1110 = vmax.f32 %v1012, 0.0
    %v1111 = vmax.f32 %v1040, 0.0
    %v1112 = vmax.f32 %v1068, 0.0
    %v1113 = vmax.f32 %v1096, 0.0
    %v1114 = vpack.c.bf16 %v1106, %v1098
    %v1115 = vpack.c.bf16 %v1107, %v1099
    %v1116 = vpack.c.bf16 %v1108, %v1100
    %v1117 = vpack.c.bf16 %v1109, %v1101
    %v1118 = vpack.c.bf16 %v1110, %v1102
    %v1119 = vpack.c.bf16 %v1111, %v1103
    %v1120 = vpack.c.bf16 %v1112, %v1104
    %v1121 = vpack.c.bf16 %v1113, %v1105
    %v1122 = vld [vmem:[#allocation8] sm:$0xff]
    %v1123 = vld [vmem:[#allocation8 + $0x8] sm:$0xff]
    %v1124 = vld [vmem:[#allocation8 + $0x10] sm:$0xff]
    %v1125 = vld [vmem:[#allocation8 + $0x18] sm:$0xff]
    %v1126 = vld [vmem:[#allocation8 + $0x20] sm:$0xff]
    %v1127 = vld [vmem:[#allocation8 + $0x28] sm:$0xff]
    %v1128 = vld [vmem:[#allocation8 + $0x30] sm:$0xff]
    %v1129 = vld [vmem:[#allocation8 + $0x38] sm:$0xff]
    %v1130 = vld [vmem:[#allocation8 + $0x40] sm:$0xff]
    %v1131 = vld [vmem:[#allocation8 + $0x48] sm:$0xff]
    %v1132 = vld [vmem:[#allocation8 + $0x50] sm:$0xff]
    %v1133 = vld [vmem:[#allocation8 + $0x58] sm:$0xff]
    %v1134 = vld [vmem:[#allocation8 + $0x60] sm:$0xff]
    %v1135 = vld [vmem:[#allocation8 + $0x68] sm:$0xff]
    %v1136 = vld [vmem:[#allocation8 + $0x70] sm:$0xff]
    %v1137 = vld [vmem:[#allocation8 + $0x78] sm:$0xff]
    %v1138 = vld [vmem:[#allocation8 + $0x80] sm:$0xff]
    %v1139 = vld [vmem:[#allocation8 + $0x88] sm:$0xff]
    %v1140 = vld [vmem:[#allocation8 + $0x90] sm:$0xff]
    %v1141 = vld [vmem:[#allocation8 + $0x98] sm:$0xff]
    %v1142 = vld [vmem:[#allocation8 + $0xa0] sm:$0xff]
    %v1143 = vld [vmem:[#allocation8 + $0xa8] sm:$0xff]
    %v1144 = vld [vmem:[#allocation8 + $0xb0] sm:$0xff]
    %v1145 = vld [vmem:[#allocation8 + $0xb8] sm:$0xff]
    %v1146 = vld [vmem:[#allocation8 + $0xc0] sm:$0xff]
    %v1147 = vld [vmem:[#allocation8 + $0xc8] sm:$0xff]
    %v1148 = vld [vmem:[#allocation8 + $0xd0] sm:$0xff]
    %v1149 = vld [vmem:[#allocation8 + $0xd8] sm:$0xff]
    %v1150 = vld [vmem:[#allocation8 + $0xe0] sm:$0xff]
    %v1151 = vld [vmem:[#allocation8 + $0xe8] sm:$0xff]
    %v1152 = vld [vmem:[#allocation8 + $0xf0] sm:$0xff]
    %v1153 = vld [vmem:[#allocation8 + $0xf8] sm:$0xff]
    %v1154 = vld [vmem:[#allocation8 + $0x100] sm:$0xff]
    %v1155 = vld [vmem:[#allocation8 + $0x108] sm:$0xff]
    %v1156 = vld [vmem:[#allocation8 + $0x110] sm:$0xff]
    %v1157 = vld [vmem:[#allocation8 + $0x118] sm:$0xff]
    %v1158 = vld [vmem:[#allocation8 + $0x120] sm:$0xff]
    %v1159 = vld [vmem:[#allocation8 + $0x128] sm:$0xff]
    %v1160 = vld [vmem:[#allocation8 + $0x130] sm:$0xff]
    %v1161 = vld [vmem:[#allocation8 + $0x138] sm:$0xff]
    %v1162 = vld [vmem:[#allocation8 + $0x140] sm:$0xff]
    %v1163 = vld [vmem:[#allocation8 + $0x148] sm:$0xff]
    %v1164 = vld [vmem:[#allocation8 + $0x150] sm:$0xff]
    %v1165 = vld [vmem:[#allocation8 + $0x158] sm:$0xff]
    %v1166 = vld [vmem:[#allocation8 + $0x160] sm:$0xff]
    %v1167 = vld [vmem:[#allocation8 + $0x168] sm:$0xff]
    %v1168 = vld [vmem:[#allocation8 + $0x170] sm:$0xff]
    %v1169 = vld [vmem:[#allocation8 + $0x178] sm:$0xff]
    %v1170 = vld [vmem:[#allocation8 + $0x180] sm:$0xff]
    %v1171 = vld [vmem:[#allocation8 + $0x188] sm:$0xff]
    %v1172 = vld [vmem:[#allocation8 + $0x190] sm:$0xff]
    %v1173 = vld [vmem:[#allocation8 + $0x198] sm:$0xff]
    %v1174 = vld [vmem:[#allocation8 + $0x1a0] sm:$0xff]
    %v1175 = vld [vmem:[#allocation8 + $0x1a8] sm:$0xff]
    %v1176 = vld [vmem:[#allocation8 + $0x1b0] sm:$0xff]
    %v1177 = vld [vmem:[#allocation8 + $0x1b8] sm:$0xff]
    %v1178 = vld [vmem:[#allocation8 + $0x1c0] sm:$0xff]
    %v1179 = vld [vmem:[#allocation8 + $0x1c8] sm:$0xff]
    %v1180 = vld [vmem:[#allocation8 + $0x1d0] sm:$0xff]
    %v1181 = vld [vmem:[#allocation8 + $0x1d8] sm:$0xff]
    %v1182 = vld [vmem:[#allocation8 + $0x1e0] sm:$0xff]
    %v1183 = vld [vmem:[#allocation8 + $0x1e8] sm:$0xff]
    %v1184 = vld [vmem:[#allocation8 + $0x1f0] sm:$0xff]
    %v1185 = vld [vmem:[#allocation8 + $0x1f8] sm:$0xff]
    %v1186 = vld [vmem:[#allocation8 + $0x200] sm:$0xff]
    %v1187 = vld [vmem:[#allocation8 + $0x208] sm:$0xff]
    %v1188 = vld [vmem:[#allocation8 + $0x210] sm:$0xff]
    %v1189 = vld [vmem:[#allocation8 + $0x218] sm:$0xff]
    %v1190 = vld [vmem:[#allocation8 + $0x220] sm:$0xff]
    %v1191 = vld [vmem:[#allocation8 + $0x228] sm:$0xff]
    %v1192 = vld [vmem:[#allocation8 + $0x230] sm:$0xff]
    %v1193 = vld [vmem:[#allocation8 + $0x238] sm:$0xff]
    %v1194 = vld [vmem:[#allocation8 + $0x240] sm:$0xff]
    %v1195 = vld [vmem:[#allocation8 + $0x248] sm:$0xff]
    %v1196 = vld [vmem:[#allocation8 + $0x250] sm:$0xff]
    %v1197 = vld [vmem:[#allocation8 + $0x258] sm:$0xff]
    %v1198 = vld [vmem:[#allocation8 + $0x260] sm:$0xff]
    %v1199 = vld [vmem:[#allocation8 + $0x268] sm:$0xff]
    %v1200 = vld [vmem:[#allocation8 + $0x270] sm:$0xff]
    %v1201 = vld [vmem:[#allocation8 + $0x278] sm:$0xff]
    %v1202 = vld [vmem:[#allocation8 + $0x280] sm:$0xff]
    %v1203 = vld [vmem:[#allocation8 + $0x288] sm:$0xff]
    %v1204 = vld [vmem:[#allocation8 + $0x290] sm:$0xff]
    %v1205 = vld [vmem:[#allocation8 + $0x298] sm:$0xff]
    %v1206 = vld [vmem:[#allocation8 + $0x2a0] sm:$0xff]
    %v1207 = vld [vmem:[#allocation8 + $0x2a8] sm:$0xff]
    %v1208 = vld [vmem:[#allocation8 + $0x2b0] sm:$0xff]
    %v1209 = vld [vmem:[#allocation8 + $0x2b8] sm:$0xff]
    %v1210 = vld [vmem:[#allocation8 + $0x2c0] sm:$0xff]
    %v1211 = vld [vmem:[#allocation8 + $0x2c8] sm:$0xff]
    %v1212 = vld [vmem:[#allocation8 + $0x2d0] sm:$0xff]
    %v1213 = vld [vmem:[#allocation8 + $0x2d8] sm:$0xff]
    %v1214 = vld [vmem:[#allocation8 + $0x2e0] sm:$0xff]
    %v1215 = vld [vmem:[#allocation8 + $0x2e8] sm:$0xff]
    %v1216 = vld [vmem:[#allocation8 + $0x2f0] sm:$0xff]
    %v1217 = vld [vmem:[#allocation8 + $0x2f8] sm:$0xff]
    %v1218 = vld [vmem:[#allocation8 + $0x300] sm:$0xff]
    %v1219 = vld [vmem:[#allocation8 + $0x308] sm:$0xff]
    %v1220 = vld [vmem:[#allocation8 + $0x310] sm:$0xff]
    %v1221 = vld [vmem:[#allocation8 + $0x318] sm:$0xff]
    %v1222 = vld [vmem:[#allocation8 + $0x320] sm:$0xff]
    %v1223 = vld [vmem:[#allocation8 + $0x328] sm:$0xff]
    %v1224 = vld [vmem:[#allocation8 + $0x330] sm:$0xff]
    %v1225 = vld [vmem:[#allocation8 + $0x338] sm:$0xff]
    %v1226 = vld [vmem:[#allocation8 + $0x340] sm:$0xff]
    %v1227 = vld [vmem:[#allocation8 + $0x348] sm:$0xff]
    %v1228 = vld [vmem:[#allocation8 + $0x350] sm:$0xff]
    %v1229 = vld [vmem:[#allocation8 + $0x358] sm:$0xff]
    %v1230 = vld [vmem:[#allocation8 + $0x360] sm:$0xff]
    %v1231 = vld [vmem:[#allocation8 + $0x368] sm:$0xff]
    %v1232 = vld [vmem:[#allocation8 + $0x370] sm:$0xff]
    %v1233 = vld [vmem:[#allocation8 + $0x378] sm:$0xff]
    %v1234 = vld [vmem:[#allocation8 + $0x380] sm:$0xff]
    %v1235 = vld [vmem:[#allocation8 + $0x388] sm:$0xff]
    %v1236 = vld [vmem:[#allocation8 + $0x390] sm:$0xff]
    %v1237 = vld [vmem:[#allocation8 + $0x398] sm:$0xff]
    %v1238 = vld [vmem:[#allocation8 + $0x3a0] sm:$0xff]
    %v1239 = vld [vmem:[#allocation8 + $0x3a8] sm:$0xff]
    %v1240 = vld [vmem:[#allocation8 + $0x3b0] sm:$0xff]
    %v1241 = vld [vmem:[#allocation8 + $0x3b8] sm:$0xff]
    %v1242 = vld [vmem:[#allocation8 + $0x3c0] sm:$0xff]
    %v1243 = vld [vmem:[#allocation8 + $0x3c8] sm:$0xff]
    %v1244 = vld [vmem:[#allocation8 + $0x3d0] sm:$0xff]
    %v1245 = vld [vmem:[#allocation8 + $0x3d8] sm:$0xff]
    %v1246 = vld [vmem:[#allocation8 + $0x3e0] sm:$0xff]
    %v1247 = vld [vmem:[#allocation8 + $0x3e8] sm:$0xff]
    %v1248 = vld [vmem:[#allocation8 + $0x3f0] sm:$0xff]
    %v1249 = vld [vmem:[#allocation8 + $0x3f8] sm:$0xff]
    %v1250 = vld [vmem:[%s4] sm:$0x3]
    %v1252 = vperm.slane %v1250, 0
    %v1253 = vperm.slane %v1250, 1
    %v1384 = vunpack.c.l.b16 %v1122
    %v1385 = vunpack.c.h.b16 %v1122
    %v1386 = vunpack.c.l.b16 %v1123
    %v1387 = vunpack.c.h.b16 %v1123
    %v1388 = vunpack.c.l.b16 %v1124
    %v1389 = vunpack.c.h.b16 %v1124
    %v1390 = vunpack.c.l.b16 %v1125
    %v1391 = vunpack.c.h.b16 %v1125
    %v1392 = vunpack.c.l.b16 %v1126
    %v1393 = vunpack.c.h.b16 %v1126
    %v1394 = vunpack.c.l.b16 %v1127
    %v1395 = vunpack.c.h.b16 %v1127
    %v1396 = vunpack.c.l.b16 %v1128
    %v1397 = vunpack.c.h.b16 %v1128
    %v1398 = vunpack.c.l.b16 %v1129
    %v1399 = vunpack.c.h.b16 %v1129
    %v1400 = vunpack.c.l.b16 %v1130
    %v1401 = vunpack.c.h.b16 %v1130
    %v1402 = vunpack.c.l.b16 %v1131
    %v1403 = vunpack.c.h.b16 %v1131
    %v1404 = vunpack.c.l.b16 %v1132
    %v1405 = vunpack.c.h.b16 %v1132
    %v1406 = vunpack.c.l.b16 %v1133
    %v1407 = vunpack.c.h.b16 %v1133
    %v1408 = vunpack.c.l.b16 %v1134
    %v1409 = vunpack.c.h.b16 %v1134
    %v1410 = vunpack.c.l.b16 %v1135
    %v1411 = vunpack.c.h.b16 %v1135
    %v1412 = vunpack.c.l.b16 %v1136
    %v1413 = vunpack.c.h.b16 %v1136
    %v1414 = vunpack.c.l.b16 %v1137
    %v1415 = vunpack.c.h.b16 %v1137
    %v1416 = vunpack.c.l.b16 %v1138
    %v1417 = vunpack.c.h.b16 %v1138
    %v1418 = vunpack.c.l.b16 %v1139
    %v1419 = vunpack.c.h.b16 %v1139
    %v1420 = vunpack.c.l.b16 %v1140
    %v1421 = vunpack.c.h.b16 %v1140
    %v1422 = vunpack.c.l.b16 %v1141
    %v1423 = vunpack.c.h.b16 %v1141
    %v1424 = vunpack.c.l.b16 %v1142
    %v1425 = vunpack.c.h.b16 %v1142
    %v1426 = vunpack.c.l.b16 %v1143
    %v1427 = vunpack.c.h.b16 %v1143
    %v1428 = vunpack.c.l.b16 %v1144
    %v1429 = vunpack.c.h.b16 %v1144
    %v1430 = vunpack.c.l.b16 %v1145
    %v1431 = vunpack.c.h.b16 %v1145
    %v1432 = vunpack.c.l.b16 %v1146
    %v1433 = vunpack.c.h.b16 %v1146
    %v1434 = vunpack.c.l.b16 %v1147
    %v1435 = vunpack.c.h.b16 %v1147
    %v1436 = vunpack.c.l.b16 %v1148
    %v1437 = vunpack.c.h.b16 %v1148
    %v1438 = vunpack.c.l.b16 %v1149
    %v1439 = vunpack.c.h.b16 %v1149
    %v1440 = vunpack.c.l.b16 %v1150
    %v1441 = vunpack.c.h.b16 %v1150
    %v1442 = vunpack.c.l.b16 %v1151
    %v1443 = vunpack.c.h.b16 %v1151
    %v1444 = vunpack.c.l.b16 %v1152
    %v1445 = vunpack.c.h.b16 %v1152
    %v1446 = vunpack.c.l.b16 %v1153
    %v1447 = vunpack.c.h.b16 %v1153
    %v1448 = vunpack.c.l.b16 %v1154
    %v1449 = vunpack.c.h.b16 %v1154
    %v1450 = vunpack.c.l.b16 %v1155
    %v1451 = vunpack.c.h.b16 %v1155
    %v1452 = vunpack.c.l.b16 %v1156
    %v1453 = vunpack.c.h.b16 %v1156
    %v1454 = vunpack.c.l.b16 %v1157
    %v1455 = vunpack.c.h.b16 %v1157
    %v1456 = vunpack.c.l.b16 %v1158
    %v1457 = vunpack.c.h.b16 %v1158
    %v1458 = vunpack.c.l.b16 %v1159
    %v1459 = vunpack.c.h.b16 %v1159
    %v1460 = vunpack.c.l.b16 %v1160
    %v1461 = vunpack.c.h.b16 %v1160
    %v1462 = vunpack.c.l.b16 %v1161
    %v1463 = vunpack.c.h.b16 %v1161
    %v1464 = vunpack.c.l.b16 %v1162
    %v1465 = vunpack.c.h.b16 %v1162
    %v1466 = vunpack.c.l.b16 %v1163
    %v1467 = vunpack.c.h.b16 %v1163
    %v1468 = vunpack.c.l.b16 %v1164
    %v1469 = vunpack.c.h.b16 %v1164
    %v1470 = vunpack.c.l.b16 %v1165
    %v1471 = vunpack.c.h.b16 %v1165
    %v1472 = vunpack.c.l.b16 %v1166
    %v1473 = vunpack.c.h.b16 %v1166
    %v1474 = vunpack.c.l.b16 %v1167
    %v1475 = vunpack.c.h.b16 %v1167
    %v1476 = vunpack.c.l.b16 %v1168
    %v1477 = vunpack.c.h.b16 %v1168
    %v1478 = vunpack.c.l.b16 %v1169
    %v1479 = vunpack.c.h.b16 %v1169
    %v1480 = vunpack.c.l.b16 %v1170
    %v1481 = vunpack.c.h.b16 %v1170
    %v1482 = vunpack.c.l.b16 %v1171
    %v1483 = vunpack.c.h.b16 %v1171
    %v1484 = vunpack.c.l.b16 %v1172
    %v1485 = vunpack.c.h.b16 %v1172
    %v1486 = vunpack.c.l.b16 %v1173
    %v1487 = vunpack.c.h.b16 %v1173
    %v1488 = vunpack.c.l.b16 %v1174
    %v1489 = vunpack.c.h.b16 %v1174
    %v1490 = vunpack.c.l.b16 %v1175
    %v1491 = vunpack.c.h.b16 %v1175
    %v1492 = vunpack.c.l.b16 %v1176
    %v1493 = vunpack.c.h.b16 %v1176
    %v1494 = vunpack.c.l.b16 %v1177
    %v1495 = vunpack.c.h.b16 %v1177
    %v1496 = vunpack.c.l.b16 %v1178
    %v1497 = vunpack.c.h.b16 %v1178
    %v1498 = vunpack.c.l.b16 %v1179
    %v1499 = vunpack.c.h.b16 %v1179
    %v1500 = vunpack.c.l.b16 %v1180
    %v1501 = vunpack.c.h.b16 %v1180
    %v1502 = vunpack.c.l.b16 %v1181
    %v1503 = vunpack.c.h.b16 %v1181
    %v1504 = vunpack.c.l.b16 %v1182
    %v1505 = vunpack.c.h.b16 %v1182
    %v1506 = vunpack.c.l.b16 %v1183
    %v1507 = vunpack.c.h.b16 %v1183
    %v1508 = vunpack.c.l.b16 %v1184
    %v1509 = vunpack.c.h.b16 %v1184
    %v1510 = vunpack.c.l.b16 %v1185
    %v1511 = vunpack.c.h.b16 %v1185
    %v1512 = vunpack.c.l.b16 %v1186
    %v1513 = vunpack.c.h.b16 %v1186
    %v1514 = vunpack.c.l.b16 %v1187
    %v1515 = vunpack.c.h.b16 %v1187
    %v1516 = vunpack.c.l.b16 %v1188
    %v1517 = vunpack.c.h.b16 %v1188
    %v1518 = vunpack.c.l.b16 %v1189
    %v1519 = vunpack.c.h.b16 %v1189
    %v1520 = vunpack.c.l.b16 %v1190
    %v1521 = vunpack.c.h.b16 %v1190
    %v1522 = vunpack.c.l.b16 %v1191
    %v1523 = vunpack.c.h.b16 %v1191
    %v1524 = vunpack.c.l.b16 %v1192
    %v1525 = vunpack.c.h.b16 %v1192
    %v1526 = vunpack.c.l.b16 %v1193
    %v1527 = vunpack.c.h.b16 %v1193
    %v1528 = vunpack.c.l.b16 %v1194
    %v1529 = vunpack.c.h.b16 %v1194
    %v1530 = vunpack.c.l.b16 %v1195
    %v1531 = vunpack.c.h.b16 %v1195
    %v1532 = vunpack.c.l.b16 %v1196
    %v1533 = vunpack.c.h.b16 %v1196
    %v1534 = vunpack.c.l.b16 %v1197
    %v1535 = vunpack.c.h.b16 %v1197
    %v1536 = vunpack.c.l.b16 %v1198
    %v1537 = vunpack.c.h.b16 %v1198
    %v1538 = vunpack.c.l.b16 %v1199
    %v1539 = vunpack.c.h.b16 %v1199
    %v1540 = vunpack.c.l.b16 %v1200
    %v1541 = vunpack.c.h.b16 %v1200
    %v1542 = vunpack.c.l.b16 %v1201
    %v1543 = vunpack.c.h.b16 %v1201
    %v1544 = vunpack.c.l.b16 %v1202
    %v1545 = vunpack.c.h.b16 %v1202
    %v1546 = vunpack.c.l.b16 %v1203
    %v1547 = vunpack.c.h.b16 %v1203
    %v1548 = vunpack.c.l.b16 %v1204
    %v1549 = vunpack.c.h.b16 %v1204
    %v1550 = vunpack.c.l.b16 %v1205
    %v1551 = vunpack.c.h.b16 %v1205
    %v1552 = vunpack.c.l.b16 %v1206
    %v1553 = vunpack.c.h.b16 %v1206
    %v1554 = vunpack.c.l.b16 %v1207
    %v1555 = vunpack.c.h.b16 %v1207
    %v1556 = vunpack.c.l.b16 %v1208
    %v1557 = vunpack.c.h.b16 %v1208
    %v1558 = vunpack.c.l.b16 %v1209
    %v1559 = vunpack.c.h.b16 %v1209
    %v1560 = vunpack.c.l.b16 %v1210
    %v1561 = vunpack.c.h.b16 %v1210
    %v1562 = vunpack.c.l.b16 %v1211
    %v1563 = vunpack.c.h.b16 %v1211
    %v1564 = vunpack.c.l.b16 %v1212
    %v1565 = vunpack.c.h.b16 %v1212
    %v1566 = vunpack.c.l.b16 %v1213
    %v1567 = vunpack.c.h.b16 %v1213
    %v1568 = vunpack.c.l.b16 %v1214
    %v1569 = vunpack.c.h.b16 %v1214
    %v1570 = vunpack.c.l.b16 %v1215
    %v1571 = vunpack.c.h.b16 %v1215
    %v1572 = vunpack.c.l.b16 %v1216
    %v1573 = vunpack.c.h.b16 %v1216
    %v1574 = vunpack.c.l.b16 %v1217
    %v1575 = vunpack.c.h.b16 %v1217
    %v1576 = vunpack.c.l.b16 %v1218
    %v1577 = vunpack.c.h.b16 %v1218
    %v1578 = vunpack.c.l.b16 %v1219
    %v1579 = vunpack.c.h.b16 %v1219
    %v1580 = vunpack.c.l.b16 %v1220
    %v1581 = vunpack.c.h.b16 %v1220
    %v1582 = vunpack.c.l.b16 %v1221
    %v1583 = vunpack.c.h.b16 %v1221
    %v1584 = vunpack.c.l.b16 %v1222
    %v1585 = vunpack.c.h.b16 %v1222
    %v1586 = vunpack.c.l.b16 %v1223
    %v1587 = vunpack.c.h.b16 %v1223
    %v1588 = vunpack.c.l.b16 %v1224
    %v1589 = vunpack.c.h.b16 %v1224
    %v1590 = vunpack.c.l.b16 %v1225
    %v1591 = vunpack.c.h.b16 %v1225
    %v1592 = vunpack.c.l.b16 %v1226
    %v1593 = vunpack.c.h.b16 %v1226
    %v1594 = vunpack.c.l.b16 %v1227
    %v1595 = vunpack.c.h.b16 %v1227
    %v1596 = vunpack.c.l.b16 %v1228
    %v1597 = vunpack.c.h.b16 %v1228
    %v1598 = vunpack.c.l.b16 %v1229
    %v1599 = vunpack.c.h.b16 %v1229
    %v1600 = vunpack.c.l.b16 %v1230
    %v1601 = vunpack.c.h.b16 %v1230
    %v1602 = vunpack.c.l.b16 %v1231
    %v1603 = vunpack.c.h.b16 %v1231
    %v1604 = vunpack.c.l.b16 %v1232
    %v1605 = vunpack.c.h.b16 %v1232
    %v1606 = vunpack.c.l.b16 %v1233
    %v1607 = vunpack.c.h.b16 %v1233
    %v1608 = vunpack.c.l.b16 %v1234
    %v1609 = vunpack.c.h.b16 %v1234
    %v1610 = vunpack.c.l.b16 %v1235
    %v1611 = vunpack.c.h.b16 %v1235
    %v1612 = vunpack.c.l.b16 %v1236
    %v1613 = vunpack.c.h.b16 %v1236
    %v1614 = vunpack.c.l.b16 %v1237
    %v1615 = vunpack.c.h.b16 %v1237
    %v1616 = vunpack.c.l.b16 %v1238
    %v1617 = vunpack.c.h.b16 %v1238
    %v1618 = vunpack.c.l.b16 %v1239
    %v1619 = vunpack.c.h.b16 %v1239
    %v1620 = vunpack.c.l.b16 %v1240
    %v1621 = vunpack.c.h.b16 %v1240
    %v1622 = vunpack.c.l.b16 %v1241
    %v1623 = vunpack.c.h.b16 %v1241
    %v1624 = vunpack.c.l.b16 %v1242
    %v1625 = vunpack.c.h.b16 %v1242
    %v1626 = vunpack.c.l.b16 %v1243
    %v1627 = vunpack.c.h.b16 %v1243
    %v1628 = vunpack.c.l.b16 %v1244
    %v1629 = vunpack.c.h.b16 %v1244
    %v1630 = vunpack.c.l.b16 %v1245
    %v1631 = vunpack.c.h.b16 %v1245
    %v1632 = vunpack.c.l.b16 %v1246
    %v1633 = vunpack.c.h.b16 %v1246
    %v1634 = vunpack.c.l.b16 %v1247
    %v1635 = vunpack.c.h.b16 %v1247
    %v1636 = vunpack.c.l.b16 %v1248
    %v1637 = vunpack.c.h.b16 %v1248
    %v1638 = vunpack.c.l.b16 %v1249
    %v1639 = vunpack.c.h.b16 %v1249
    %v1640 = vpack.c.b16 %v1386, %v1384
    %v1641 = vpack.c.b16 %v1387, %v1385
    %v1642 = vpack.c.b16 %v1390, %v1388
    %v1643 = vpack.c.b16 %v1391, %v1389
    %v1644 = vpack.c.b16 %v1394, %v1392
    %v1645 = vpack.c.b16 %v1395, %v1393
    %v1646 = vpack.c.b16 %v1398, %v1396
    %v1647 = vpack.c.b16 %v1399, %v1397
    %v1648 = vpack.c.b16 %v1402, %v1400
    %v1649 = vpack.c.b16 %v1403, %v1401
    %v1650 = vpack.c.b16 %v1406, %v1404
    %v1651 = vpack.c.b16 %v1407, %v1405
    %v1652 = vpack.c.b16 %v1410, %v1408
    %v1653 = vpack.c.b16 %v1411, %v1409
    %v1654 = vpack.c.b16 %v1414, %v1412
    %v1655 = vpack.c.b16 %v1415, %v1413
    %v1656 = vpack.c.b16 %v1418, %v1416
    %v1657 = vpack.c.b16 %v1419, %v1417
    %v1658 = vpack.c.b16 %v1422, %v1420
    %v1659 = vpack.c.b16 %v1423, %v1421
    %v1660 = vpack.c.b16 %v1426, %v1424
    %v1661 = vpack.c.b16 %v1427, %v1425
    %v1662 = vpack.c.b16 %v1430, %v1428
    %v1663 = vpack.c.b16 %v1431, %v1429
    %v1664 = vpack.c.b16 %v1434, %v1432
    %v1665 = vpack.c.b16 %v1435, %v1433
    %v1666 = vpack.c.b16 %v1438, %v1436
    %v1667 = vpack.c.b16 %v1439, %v1437
    %v1668 = vpack.c.b16 %v1442, %v1440
    %v1669 = vpack.c.b16 %v1443, %v1441
    %v1670 = vpack.c.b16 %v1446, %v1444
    %v1671 = vpack.c.b16 %v1447, %v1445
    %v1672 = vpack.c.b16 %v1450, %v1448
    %v1673 = vpack.c.b16 %v1451, %v1449
    %v1674 = vpack.c.b16 %v1454, %v1452
    %v1675 = vpack.c.b16 %v1455, %v1453
    %v1676 = vpack.c.b16 %v1458, %v1456
    %v1677 = vpack.c.b16 %v1459, %v1457
    %v1678 = vpack.c.b16 %v1462, %v1460
    %v1679 = vpack.c.b16 %v1463, %v1461
    %v1680 = vpack.c.b16 %v1466, %v1464
    %v1681 = vpack.c.b16 %v1467, %v1465
    %v1682 = vpack.c.b16 %v1470, %v1468
    %v1683 = vpack.c.b16 %v1471, %v1469
    %v1684 = vpack.c.b16 %v1474, %v1472
    %v1685 = vpack.c.b16 %v1475, %v1473
    %v1686 = vpack.c.b16 %v1478, %v1476
    %v1687 = vpack.c.b16 %v1479, %v1477
    %v1688 = vpack.c.b16 %v1482, %v1480
    %v1689 = vpack.c.b16 %v1483, %v1481
    %v1690 = vpack.c.b16 %v1486, %v1484
    %v1691 = vpack.c.b16 %v1487, %v1485
    %v1692 = vpack.c.b16 %v1490, %v1488
    %v1693 = vpack.c.b16 %v1491, %v1489
    %v1694 = vpack.c.b16 %v1494, %v1492
    %v1695 = vpack.c.b16 %v1495, %v1493
    %v1696 = vpack.c.b16 %v1498, %v1496
    %v1697 = vpack.c.b16 %v1499, %v1497
    %v1698 = vpack.c.b16 %v1502, %v1500
    %v1699 = vpack.c.b16 %v1503, %v1501
    %v1700 = vpack.c.b16 %v1506, %v1504
    %v1701 = vpack.c.b16 %v1507, %v1505
    %v1702 = vpack.c.b16 %v1510, %v1508
    %v1703 = vpack.c.b16 %v1511, %v1509
    %v1704 = vpack.c.b16 %v1514, %v1512
    %v1705 = vpack.c.b16 %v1515, %v1513
    %v1706 = vpack.c.b16 %v1518, %v1516
    %v1707 = vpack.c.b16 %v1519, %v1517
    %v1708 = vpack.c.b16 %v1522, %v1520
    %v1709 = vpack.c.b16 %v1523, %v1521
    %v1710 = vpack.c.b16 %v1526, %v1524
    %v1711 = vpack.c.b16 %v1527, %v1525
    %v1712 = vpack.c.b16 %v1530, %v1528
    %v1713 = vpack.c.b16 %v1531, %v1529
    %v1714 = vpack.c.b16 %v1534, %v1532
    %v1715 = vpack.c.b16 %v1535, %v1533
    %v1716 = vpack.c.b16 %v1538, %v1536
    %v1717 = vpack.c.b16 %v1539, %v1537
    %v1718 = vpack.c.b16 %v1542, %v1540
    %v1719 = vpack.c.b16 %v1543, %v1541
    %v1720 = vpack.c.b16 %v1546, %v1544
    %v1721 = vpack.c.b16 %v1547, %v1545
    %v1722 = vpack.c.b16 %v1550, %v1548
    %v1723 = vpack.c.b16 %v1551, %v1549
    %v1724 = vpack.c.b16 %v1554, %v1552
    %v1725 = vpack.c.b16 %v1555, %v1553
    %v1726 = vpack.c.b16 %v1558, %v1556
    %v1727 = vpack.c.b16 %v1559, %v1557
    %v1728 = vpack.c.b16 %v1562, %v1560
    %v1729 = vpack.c.b16 %v1563, %v1561
    %v1730 = vpack.c.b16 %v1566, %v1564
    %v1731 = vpack.c.b16 %v1567, %v1565
    %v1732 = vpack.c.b16 %v1570, %v1568
    %v1733 = vpack.c.b16 %v1571, %v1569
    %v1734 = vpack.c.b16 %v1574, %v1572
    %v1735 = vpack.c.b16 %v1575, %v1573
    %v1736 = vpack.c.b16 %v1578, %v1576
    %v1737 = vpack.c.b16 %v1579, %v1577
    %v1738 = vpack.c.b16 %v1582, %v1580
    %v1739 = vpack.c.b16 %v1583, %v1581
    %v1740 = vpack.c.b16 %v1586, %v1584
    %v1741 = vpack.c.b16 %v1587, %v1585
    %v1742 = vpack.c.b16 %v1590, %v1588
    %v1743 = vpack.c.b16 %v1591, %v1589
    %v1744 = vpack.c.b16 %v1594, %v1592
    %v1745 = vpack.c.b16 %v1595, %v1593
    %v1746 = vpack.c.b16 %v1598, %v1596
    %v1747 = vpack.c.b16 %v1599, %v1597
    %v1748 = vpack.c.b16 %v1602, %v1600
    %v1749 = vpack.c.b16 %v1603, %v1601
    %v1750 = vpack.c.b16 %v1606, %v1604
    %v1751 = vpack.c.b16 %v1607, %v1605
    %v1752 = vpack.c.b16 %v1610, %v1608
    %v1753 = vpack.c.b16 %v1611, %v1609
    %v1754 = vpack.c.b16 %v1614, %v1612
    %v1755 = vpack.c.b16 %v1615, %v1613
    %v1756 = vpack.c.b16 %v1618, %v1616
    %v1757 = vpack.c.b16 %v1619, %v1617
    %v1758 = vpack.c.b16 %v1622, %v1620
    %v1759 = vpack.c.b16 %v1623, %v1621
    %v1760 = vpack.c.b16 %v1626, %v1624
    %v1761 = vpack.c.b16 %v1627, %v1625
    %v1762 = vpack.c.b16 %v1630, %v1628
    %v1763 = vpack.c.b16 %v1631, %v1629
    %v1764 = vpack.c.b16 %v1634, %v1632
    %v1765 = vpack.c.b16 %v1635, %v1633
    %v1766 = vpack.c.b16 %v1638, %v1636
    %v1767 = vpack.c.b16 %v1639, %v1637
    %1896 = vmatpush.bf16.msra.mxu0 %v1654
    %1897 = vmatpush.bf16.msra.mxu0 %v1652
    %1898 = vmatpush.bf16.msra.mxu0 %v1650
    %1899 = vmatpush.bf16.msra.mxu0 %v1648
    %1900 = vmatpush.bf16.msra.mxu0 %v1646
    %1901 = vmatpush.bf16.msra.mxu0 %v1644
    %1902 = vmatpush.bf16.msra.mxu0 %v1642
    %1903 = vmatpush.bf16.msra.mxu0 %v1640
    %1904 = vmatmul.bf16.gmra.mxu0 %v1114
    %v1905 = vpop.f32.mrf.mxu0
    %v1906 = vadd.f32 %v1252, %v1905
    %v1907 = vpop.f32.mrf.mxu0
    %v1908 = vadd.f32 %v1252, %v1907
    %1909 = vdwg.mxu0
    %1910 = vmatpush.bf16.msra.mxu0 %v1670
    %1911 = vmatpush.bf16.msra.mxu0 %v1668
    %1912 = vmatpush.bf16.msra.mxu0 %v1666
    %1913 = vmatpush.bf16.msra.mxu0 %v1664
    %1914 = vmatpush.bf16.msra.mxu0 %v1662
    %1915 = vmatpush.bf16.msra.mxu0 %v1660
    %1916 = vmatpush.bf16.msra.mxu0 %v1658
    %1917 = vmatpush.bf16.msra.mxu0 %v1656
    %1918 = vmatmul.bf16.gmra.mxu0 %v1115
    %v1919 = vpop.f32.mrf.mxu0
    %v1920 = vadd.f32 %v1906, %v1919
    %v1921 = vpop.f32.mrf.mxu0
    %v1922 = vadd.f32 %v1908, %v1921
    %1923 = vdwg.mxu0
    %1924 = vmatpush.bf16.msra.mxu0 %v1686
    %1925 = vmatpush.bf16.msra.mxu0 %v1684
    %1926 = vmatpush.bf16.msra.mxu0 %v1682
    %1927 = vmatpush.bf16.msra.mxu0 %v1680
    %1928 = vmatpush.bf16.msra.mxu0 %v1678
    %1929 = vmatpush.bf16.msra.mxu0 %v1676
    %1930 = vmatpush.bf16.msra.mxu0 %v1674
    %1931 = vmatpush.bf16.msra.mxu0 %v1672
    %1932 = vmatmul.bf16.gmra.mxu0 %v1116
    %v1933 = vpop.f32.mrf.mxu0
    %v1934 = vadd.f32 %v1920, %v1933
    %v1935 = vpop.f32.mrf.mxu0
    %v1936 = vadd.f32 %v1922, %v1935
    %1937 = vdwg.mxu0
    %1938 = vmatpush.bf16.msra.mxu0 %v1702
    %1939 = vmatpush.bf16.msra.mxu0 %v1700
    %1940 = vmatpush.bf16.msra.mxu0 %v1698
    %1941 = vmatpush.bf16.msra.mxu0 %v1696
    %1942 = vmatpush.bf16.msra.mxu0 %v1694
    %1943 = vmatpush.bf16.msra.mxu0 %v1692
    %1944 = vmatpush.bf16.msra.mxu0 %v1690
    %1945 = vmatpush.bf16.msra.mxu0 %v1688
    %1946 = vmatmul.bf16.gmra.mxu0 %v1117
    %v1947 = vpop.f32.mrf.mxu0
    %v1948 = vadd.f32 %v1934, %v1947
    %v1949 = vpop.f32.mrf.mxu0
    %v1950 = vadd.f32 %v1936, %v1949
    %1951 = vdwg.mxu0
    %1952 = vmatpush.bf16.msra.mxu0 %v1718
    %1953 = vmatpush.bf16.msra.mxu0 %v1716
    %1954 = vmatpush.bf16.msra.mxu0 %v1714
    %1955 = vmatpush.bf16.msra.mxu0 %v1712
    %1956 = vmatpush.bf16.msra.mxu0 %v1710
    %1957 = vmatpush.bf16.msra.mxu0 %v1708
    %1958 = vmatpush.bf16.msra.mxu0 %v1706
    %1959 = vmatpush.bf16.msra.mxu0 %v1704
    %1960 = vmatmul.bf16.gmra.mxu0 %v1118
    %v1961 = vpop.f32.mrf.mxu0
    %v1962 = vadd.f32 %v1948, %v1961
    %v1963 = vpop.f32.mrf.mxu0
    %v1964 = vadd.f32 %v1950, %v1963
    %1965 = vdwg.mxu0
    %1966 = vmatpush.bf16.msra.mxu0 %v1734
    %1967 = vmatpush.bf16.msra.mxu0 %v1732
    %1968 = vmatpush.bf16.msra.mxu0 %v1730
    %1969 = vmatpush.bf16.msra.mxu0 %v1728
    %1970 = vmatpush.bf16.msra.mxu0 %v1726
    %1971 = vmatpush.bf16.msra.mxu0 %v1724
    %1972 = vmatpush.bf16.msra.mxu0 %v1722
    %1973 = vmatpush.bf16.msra.mxu0 %v1720
    %1974 = vmatmul.bf16.gmra.mxu0 %v1119
    %v1975 = vpop.f32.mrf.mxu0
    %v1976 = vadd.f32 %v1962, %v1975
    %v1977 = vpop.f32.mrf.mxu0
    %v1978 = vadd.f32 %v1964, %v1977
    %1979 = vdwg.mxu0
    %1980 = vmatpush.bf16.msra.mxu0 %v1750
    %1981 = vmatpush.bf16.msra.mxu0 %v1748
    %1982 = vmatpush.bf16.msra.mxu0 %v1746
    %1983 = vmatpush.bf16.msra.mxu0 %v1744
    %1984 = vmatpush.bf16.msra.mxu0 %v1742
    %1985 = vmatpush.bf16.msra.mxu0 %v1740
    %1986 = vmatpush.bf16.msra.mxu0 %v1738
    %1987 = vmatpush.bf16.msra.mxu0 %v1736
    %1988 = vmatmul.bf16.gmra.mxu0 %v1120
    %v1989 = vpop.f32.mrf.mxu0
    %v1990 = vadd.f32 %v1976, %v1989
    %v1991 = vpop.f32.mrf.mxu0
    %v1992 = vadd.f32 %v1978, %v1991
    %1993 = vdwg.mxu0
    %1994 = vmatpush.bf16.msra.mxu0 %v1766
    %1995 = vmatpush.bf16.msra.mxu0 %v1764
    %1996 = vmatpush.bf16.msra.mxu0 %v1762
    %1997 = vmatpush.bf16.msra.mxu0 %v1760
    %1998 = vmatpush.bf16.msra.mxu0 %v1758
    %1999 = vmatpush.bf16.msra.mxu0 %v1756
    %2000 = vmatpush.bf16.msra.mxu0 %v1754
    %2001 = vmatpush.bf16.msra.mxu0 %v1752
    %2002 = vmatmul.bf16.gmra.mxu0 %v1121
    %v2003 = vpop.f32.mrf.mxu0
    %v2004 = vadd.f32 %v1990, %v2003
    %v2005 = vpop.f32.mrf.mxu0
    %v2006 = vadd.f32 %v1992, %v2005
    %2007 = vdwg.mxu0
    %2008 = vmatpush.bf16.msra.mxu0 %v1655
    %2009 = vmatpush.bf16.msra.mxu0 %v1653
    %2010 = vmatpush.bf16.msra.mxu0 %v1651
    %2011 = vmatpush.bf16.msra.mxu0 %v1649
    %2012 = vmatpush.bf16.msra.mxu0 %v1647
    %2013 = vmatpush.bf16.msra.mxu0 %v1645
    %2014 = vmatpush.bf16.msra.mxu0 %v1643
    %2015 = vmatpush.bf16.msra.mxu0 %v1641
    %2016 = vmatmul.bf16.gmra.mxu0 %v1114
    %v2017 = vpop.f32.mrf.mxu0
    %v2018 = vadd.f32 %v1253, %v2017
    %v2019 = vpop.f32.mrf.mxu0
    %v2020 = vadd.f32 %v1253, %v2019
    %2021 = vdwg.mxu0
    %2022 = vmatpush.bf16.msra.mxu0 %v1671
    %2023 = vmatpush.bf16.msra.mxu0 %v1669
    %2024 = vmatpush.bf16.msra.mxu0 %v1667
    %2025 = vmatpush.bf16.msra.mxu0 %v1665
    %2026 = vmatpush.bf16.msra.mxu0 %v1663
    %2027 = vmatpush.bf16.msra.mxu0 %v1661
    %2028 = vmatpush.bf16.msra.mxu0 %v1659
    %2029 = vmatpush.bf16.msra.mxu0 %v1657
    %2030 = vmatmul.bf16.gmra.mxu0 %v1115
    %v2031 = vpop.f32.mrf.mxu0
    %v2032 = vadd.f32 %v2018, %v2031
    %v2033 = vpop.f32.mrf.mxu0
    %v2034 = vadd.f32 %v2020, %v2033
    %2035 = vdwg.mxu0
    %2036 = vmatpush.bf16.msra.mxu0 %v1687
    %2037 = vmatpush.bf16.msra.mxu0 %v1685
    %2038 = vmatpush.bf16.msra.mxu0 %v1683
    %2039 = vmatpush.bf16.msra.mxu0 %v1681
    %2040 = vmatpush.bf16.msra.mxu0 %v1679
    %2041 = vmatpush.bf16.msra.mxu0 %v1677
    %2042 = vmatpush.bf16.msra.mxu0 %v1675
    %2043 = vmatpush.bf16.msra.mxu0 %v1673
    %2044 = vmatmul.bf16.gmra.mxu0 %v1116
    %v2045 = vpop.f32.mrf.mxu0
    %v2046 = vadd.f32 %v2032, %v2045
    %v2047 = vpop.f32.mrf.mxu0
    %v2048 = vadd.f32 %v2034, %v2047
    %2049 = vdwg.mxu0
    %2050 = vmatpush.bf16.msra.mxu0 %v1703
    %2051 = vmatpush.bf16.msra.mxu0 %v1701
    %2052 = vmatpush.bf16.msra.mxu0 %v1699
    %2053 = vmatpush.bf16.msra.mxu0 %v1697
    %2054 = vmatpush.bf16.msra.mxu0 %v1695
    %2055 = vmatpush.bf16.msra.mxu0 %v1693
    %2056 = vmatpush.bf16.msra.mxu0 %v1691
    %2057 = vmatpush.bf16.msra.mxu0 %v1689
    %2058 = vmatmul.bf16.gmra.mxu0 %v1117
    %v2059 = vpop.f32.mrf.mxu0
    %v2060 = vadd.f32 %v2046, %v2059
    %v2061 = vpop.f32.mrf.mxu0
    %v2062 = vadd.f32 %v2048, %v2061
    %2063 = vdwg.mxu0
    %2064 = vmatpush.bf16.msra.mxu0 %v1719
    %2065 = vmatpush.bf16.msra.mxu0 %v1717
    %2066 = vmatpush.bf16.msra.mxu0 %v1715
    %2067 = vmatpush.bf16.msra.mxu0 %v1713
    %2068 = vmatpush.bf16.msra.mxu0 %v1711
    %2069 = vmatpush.bf16.msra.mxu0 %v1709
    %2070 = vmatpush.bf16.msra.mxu0 %v1707
    %2071 = vmatpush.bf16.msra.mxu0 %v1705
    %2072 = vmatmul.bf16.gmra.mxu0 %v1118
    %v2073 = vpop.f32.mrf.mxu0
    %v2074 = vadd.f32 %v2060, %v2073
    %v2075 = vpop.f32.mrf.mxu0
    %v2076 = vadd.f32 %v2062, %v2075
    %2077 = vdwg.mxu0
    %2078 = vmatpush.bf16.msra.mxu0 %v1735
    %2079 = vmatpush.bf16.msra.mxu0 %v1733
    %2080 = vmatpush.bf16.msra.mxu0 %v1731
    %2081 = vmatpush.bf16.msra.mxu0 %v1729
    %2082 = vmatpush.bf16.msra.mxu0 %v1727
    %2083 = vmatpush.bf16.msra.mxu0 %v1725
    %2084 = vmatpush.bf16.msra.mxu0 %v1723
    %2085 = vmatpush.bf16.msra.mxu0 %v1721
    %2086 = vmatmul.bf16.gmra.mxu0 %v1119
    %v2087 = vpop.f32.mrf.mxu0
    %v2088 = vadd.f32 %v2074, %v2087
    %v2089 = vpop.f32.mrf.mxu0
    %v2090 = vadd.f32 %v2076, %v2089
    %2091 = vdwg.mxu0
    %2092 = vmatpush.bf16.msra.mxu0 %v1751
    %2093 = vmatpush.bf16.msra.mxu0 %v1749
    %2094 = vmatpush.bf16.msra.mxu0 %v1747
    %2095 = vmatpush.bf16.msra.mxu0 %v1745
    %2096 = vmatpush.bf16.msra.mxu0 %v1743
    %2097 = vmatpush.bf16.msra.mxu0 %v1741
    %2098 = vmatpush.bf16.msra.mxu0 %v1739
    %2099 = vmatpush.bf16.msra.mxu0 %v1737
    %2100 = vmatmul.bf16.gmra.mxu0 %v1120
    %v2101 = vpop.f32.mrf.mxu0
    %v2102 = vadd.f32 %v2088, %v2101
    %v2103 = vpop.f32.mrf.mxu0
    %v2104 = vadd.f32 %v2090, %v2103
    %2105 = vdwg.mxu0
    %2106 = vmatpush.bf16.msra.mxu0 %v1767
    %2107 = vmatpush.bf16.msra.mxu0 %v1765
    %2108 = vmatpush.bf16.msra.mxu0 %v1763
    %2109 = vmatpush.bf16.msra.mxu0 %v1761
    %2110 = vmatpush.bf16.msra.mxu0 %v1759
    %2111 = vmatpush.bf16.msra.mxu0 %v1757
    %2112 = vmatpush.bf16.msra.mxu0 %v1755
    %2113 = vmatpush.bf16.msra.mxu0 %v1753
    %2114 = vmatmul.bf16.gmra.mxu0 %v1121
    %v2115 = vpop.f32.mrf.mxu0
    %v2116 = vadd.f32 %v2102, %v2115
    %v2117 = vpop.f32.mrf.mxu0
    %v2118 = vadd.f32 %v2104, %v2117
    %2119 = vdwg.mxu0
    %2120 = vst [vmem:[#allocation10] sm:$0xff] %v2004
    %2121 = vst [vmem:[#allocation10 + $0x8] sm:$0xff] %v2116
    %2122 = vst [vmem:[#allocation10 + $0x10] sm:$0xff] %v2006
    %2123 = vst [vmem:[#allocation10 + $0x18] sm:$0xff] %v2118
    // Predicated region
    $region38: #{tpu_custom_call.1} parent=1 // pred_check
      _
    $region39: #{tpu_custom_call.1} parent=1 // pred_check_branch
      %2125 = sbr.rel (0) target = $region41
    $region40: #{tpu_custom_call.1} parent=1 // pred_region
      %2127 = vsyncadd [#allocation4], 0
      %s2128 = sshll.u32 [#allocation10], 4
      %s2129 = int_to_ptr.vmem [resolvable:$true] %s2128
      %s2130 = sshll.u32 %s5, 4
      %s2131 = int_to_ptr.hbm [resolvable:$true] %s2130
      %2136 = dma.vmem_to_hbm [thread:$0]  %s2129, 512, %s2131, [#allocation4], 256, 256, 16
    $region41: #{tpu_custom_call.1} parent=1 // pred_fallthru
      _
    // Predicated region
    $region42: #{tpu_custom_call.1} parent=1 // pred_check
      _
    $region43: #{tpu_custom_call.1} parent=1 // pred_check_branch
      %2138 = sbr.rel (0) target = $region45
    $region44: #{tpu_custom_call.1} parent=1 // pred_region
      %2140 = dma.done [#allocation4], 512
    $region45: #{tpu_custom_call.1} parent=1 // pred_fallthru
      _
    %2141 = vsyncpa [#allocation3], 1
    %2142 = vsyncpa [#allocation6], 1
    %2143 = vsyncpa [#allocation9], 1
    %2144 = vsyncpa [#allocation4], 1

</llo_original>
